<compile_context>
chip_gen: v6e
topology: v6e:2x2x1
jax: 0.10.0
libtpu: 0.0.40
codegen_flags: <defaults>
</compile_context>

<pallas_src>
import jax
import jax.numpy as jnp
from jax.experimental import pallas as pl
from jax.experimental.pallas import tpu as pltpu

# Logical (PyTorch) dims.
D_IN, D1, D2, D3, D_OUT = 28 * 28, 400, 128, 84, 10
# Lane-dense (multiple-of-128) padded feature dims used by the kernel.
# Note: the input feature dim (784) is NOT padded; Mosaic handles K internally.
D1_P, D2_P, D3_P, D_OUT_P = 512, 128, 128, 128


def _round_up(x, m):
    return (x + m - 1) // m * m


def _cdiv(a, b):
    return (a + b - 1) // b


def _has_two_tensorcores():
    """v7x has 2 TensorCores per chip; v5e/v6e have 1."""
    try:
        kind = jax.devices()[0].device_kind.lower()
    except Exception:
        return False
    return "v7" in kind or "7x" in kind


def mlp_kernel(x_ref,
               w1_ref, b1_ref,
               w2_ref, b2_ref,
               w3_ref, b3_ref,
               w4_ref, b4_ref,
               o_ref):
    """All four Linear+ReLU layers fused for one batch tile.

    Matmuls run on the MXU with f32 accumulation; bias-add/ReLU stay in f32 on
    the VPU; hidden activations are handed to the next layer in the compute
    dtype (bf16 on the fast path) to halve inter-layer VMEM traffic.
    """
    compute_dtype = w1_ref.dtype

    def layer(h, w_ref, b_ref, out_dtype):
        acc = jnp.dot(h, w_ref[...], preferred_element_type=jnp.float32)
        return jnp.maximum(acc + b_ref[...], 0.0).astype(out_dtype)

    h = x_ref[...]                                 # already in compute dtype
    h = layer(h, w1_ref, b1_ref, compute_dtype)
    h = layer(h, w2_ref, b2_ref, compute_dtype)
    h = layer(h, w3_ref, b3_ref, compute_dtype)
    o_ref[...] = layer(h, w4_ref, b4_ref, o_ref.dtype)


def init_params(key):
    """Logical params; weights stored as (in, out) = transpose of torch layout."""
    dims = [(D_IN, D1), (D1, D2), (D2, D3), (D3, D_OUT)]
    params = []
    for i, (din, dout) in enumerate(dims):
        kw, kb = jax.random.split(jax.random.fold_in(key, i))
        bound = 1.0 / (din ** 0.5)   # matches torch.nn.Linear default init range
        w = jax.random.uniform(kw, (din, dout), jnp.float32, -bound, bound)
        b = jax.random.uniform(kb, (1, dout), jnp.float32, -bound, bound)
        params += [w, b]
    return tuple(params)


def prepare_params(params, compute_dtype=jnp.bfloat16):
    """Zero-pad weights/biases to lane-dense output shapes and cast weights to
    the MXU compute dtype. Biases stay f32 (added onto the f32 accumulator).
    Zero-padded columns produce relu(0)=0 and matching zero rows in the next
    layer, so the math is identical to the unpadded network."""
    w1, b1, w2, b2, w3, b3, w4, b4 = params

    def pad2(a, rows, cols):
        return jnp.pad(a, ((0, rows - a.shape[0]), (0, cols - a.shape[1])))

    return (
        pad2(w1, D_IN, D1_P).astype(compute_dtype),   pad2(b1, 1, D1_P),
        pad2(w2, D1_P, D2_P).astype(compute_dtype),   pad2(b2, 1, D2_P),
        pad2(w3, D2_P, D3_P).astype(compute_dtype),   pad2(b3, 1, D3_P),
        pad2(w4, D3_P, D_OUT_P).astype(compute_dtype), pad2(b4, 1, D_OUT_P),
    )


def net_forward(img, padded_params, *, tm=512):
    """img: (N, 1, 28, 28). Returns (N, 10) float32."""
    compute_dtype = padded_params[0].dtype
    # torch: img.view(-1, 784); cast fused with the reshape (single HBM pass).
    x = jnp.asarray(img).reshape(-1, D_IN).astype(compute_dtype)
    n = x.shape[0]

    # Batch tile selection.
    tm = max(8, min(int(tm), 512))
    if _has_two_tensorcores():
        # v7x: >=2 steps, rounded to an even count so both TCs get equal work.
        steps = _round_up(max(2, _cdiv(n, tm)), 2)
        tm = _round_up(_cdiv(n, steps), 8)
    else:
        # v5e / v6e: single TensorCore — largest tile that covers the batch.
        tm = min(tm, _round_up(n, 8))
    grid = _cdiv(n, tm)

    w1, b1, w2, b2, w3, b3, w4, b4 = padded_params

    # Weights/biases (~1 MiB bf16 after padding) stay fully resident in VMEM
    # (block == full array); only the batch dimension is tiled.
    full = lambda shape: pl.BlockSpec(shape, lambda i: (0, 0))

    out = pl.pallas_call(
        mlp_kernel,
        out_shape=jax.ShapeDtypeStruct((n, D_OUT_P), compute_dtype),
        grid_spec=pltpu.PrefetchScalarGridSpec(
            num_scalar_prefetch=0,
            grid=(grid,),
            in_specs=[
                # x tile: last dim == full array dim (784), no feature pad.
                pl.BlockSpec((tm, D_IN), lambda i: (i, 0)),
                full((D_IN, D1_P)),     full((1, D1_P)),
                full((D1_P, D2_P)),     full((1, D2_P)),
                full((D2_P, D3_P)),     full((1, D3_P)),
                full((D3_P, D_OUT_P)),  full((1, D_OUT_P)),
            ],
            # Lane-dense (128-wide) unmasked output store.
            out_specs=pl.BlockSpec((tm, D_OUT_P), lambda i: (i, 0)),
        ),
        compiler_params=pltpu.CompilerParams(
            dimension_semantics=("parallel",)),
    )(x, w1, b1, w2, b2, w3, b3, w4, b4)

    # Invariant: rows beyond n (partial last block) and columns beyond 10 are
    # never observed — every op above is row-independent and we slice them off.
    return out[:n, :D_OUT].astype(jnp.float32)


def net_reference(img, params):
    """Pure-JAX f32 reference of the torch forward pass."""
    w1, b1, w2, b2, w3, b3, w4, b4 = params
    x = img.reshape(-1, D_IN)
    x = jnp.maximum(x @ w1 + b1, 0.0)
    x = jnp.maximum(x @ w2 + b2, 0.0)
    x = jnp.maximum(x @ w3 + b3, 0.0)
    x = jnp.maximum(x @ w4 + b4, 0.0)
    return x


if __name__ == "__main__":
    key = jax.random.PRNGKey(0)
    k_img, k_par = jax.random.split(key)
    logical_params = init_params(k_par)

    # --- Small-shape check: full-f32 compute path, tight tolerance ---
    batch = 8
    img = jax.random.normal(k_img, (batch, 1, 28, 28), jnp.float32)  # NCHW
    out_f32 = net_forward(img, prepare_params(logical_params, jnp.float32))
    out_f32 = jax.block_until_ready(out_f32)
    ref = net_reference(img, logical_params)
    assert out_f32.shape == (batch, 10)
    assert jnp.allclose(out_f32, ref, atol=1e-3, rtol=1e-3)

    # --- Larger batch: exercises the bf16 weight+activation fast path ---
    big = 512
    img_big = jax.random.normal(jax.random.fold_in(key, 7),
                                (big, 1, 28, 28), jnp.float32)
    out_bf16 = net_forward(img_big, prepare_params(logical_params, jnp.bfloat16))
    out_bf16 = jax.block_until_ready(out_bf16)
    ref_big = net_reference(img_big, logical_params)
    assert out_bf16.shape == (big, 10)
    assert jnp.allclose(out_bf16, ref_big, atol=5e-2, rtol=5e-2)

    print("KERNEL_OK")
</pallas_src>

<mosaic_0001>
module attributes {stable_mosaic.version = 11 : i64} {
  func.func @mlp_kernel(%arg0: i32, %arg1: memref<8x784xf32, #tpu.memory_space<vmem>>, %arg2: memref<784x512xf32, #tpu.memory_space<vmem>>, %arg3: memref<1x512xf32, #tpu.memory_space<vmem>>, %arg4: memref<512x128xf32, #tpu.memory_space<vmem>>, %arg5: memref<1x128xf32, #tpu.memory_space<vmem>>, %arg6: memref<128x128xf32, #tpu.memory_space<vmem>>, %arg7: memref<1x128xf32, #tpu.memory_space<vmem>>, %arg8: memref<128x128xf32, #tpu.memory_space<vmem>>, %arg9: memref<1x128xf32, #tpu.memory_space<vmem>>, %arg10: memref<8x128xf32, #tpu.memory_space<vmem>>) attributes {dimension_semantics = [#tpu.dimension_semantics<parallel>], iteration_bounds = array<i64: 1>, scalar_prefetch = 0 : i64, scratch_operands = 0 : i64, tpu.core_type = #tpu.core_type<tc>, window_params = [{transform_indices = @transform_0, window_bounds = array<i64: 8, 784>}, {pipeline_mode = #tpu.pipeline_mode<synchronous>, transform_indices = @transform_1, window_bounds = array<i64: 784, 512>}, {pipeline_mode = #tpu.pipeline_mode<synchronous>, transform_indices = @transform_2, window_bounds = array<i64: 1, 512>}, {pipeline_mode = #tpu.pipeline_mode<synchronous>, transform_indices = @transform_3, window_bounds = array<i64: 512, 128>}, {pipeline_mode = #tpu.pipeline_mode<synchronous>, transform_indices = @transform_4, window_bounds = array<i64: 1, 128>}, {pipeline_mode = #tpu.pipeline_mode<synchronous>, transform_indices = @transform_5, window_bounds = array<i64: 128, 128>}, {pipeline_mode = #tpu.pipeline_mode<synchronous>, transform_indices = @transform_6, window_bounds = array<i64: 1, 128>}, {pipeline_mode = #tpu.pipeline_mode<synchronous>, transform_indices = @transform_7, window_bounds = array<i64: 128, 128>}, {pipeline_mode = #tpu.pipeline_mode<synchronous>, transform_indices = @transform_8, window_bounds = array<i64: 1, 128>}, {transform_indices = @transform_9, window_bounds = array<i64: 8, 128>}]} {
    %c0 = arith.constant 0 : index
    %c0_0 = arith.constant 0 : index
    %0 = vector.load %arg1[%c0, %c0_0] : memref<8x784xf32, #tpu.memory_space<vmem>>, vector<8x784xf32>
    %c0_1 = arith.constant 0 : index
    %c0_2 = arith.constant 0 : index
    %1 = vector.load %arg2[%c0_1, %c0_2] : memref<784x512xf32, #tpu.memory_space<vmem>>, vector<784x512xf32>
    %cst = arith.constant dense<0.000000e+00> : vector<8x512xf32>
    %2 = tpu.matmul %0, %1, %cst {dimension_numbers = #tpu.dot_dimension_numbers<[1], [0], [0], [1], [0, 0, 1, 1], [], []>} : vector<8x784xf32>, vector<784x512xf32>, vector<8x512xf32> -> vector<8x512xf32>
    %c0_3 = arith.constant 0 : index
    %c0_4 = arith.constant 0 : index
    %3 = vector.load %arg3[%c0_3, %c0_4] : memref<1x512xf32, #tpu.memory_space<vmem>>, vector<1x512xf32>
    %4 = vector.broadcast %3 : vector<1x512xf32> to vector<8x512xf32>
    %5 = arith.addf %2, %4 : vector<8x512xf32>
    %cst_5 = arith.constant 0.000000e+00 : f32
    %6 = vector.broadcast %cst_5 : f32 to vector<8x512xf32>
    %7 = arith.maximumf %5, %6 : vector<8x512xf32>
    %c0_6 = arith.constant 0 : index
    %c0_7 = arith.constant 0 : index
    %8 = vector.load %arg4[%c0_6, %c0_7] : memref<512x128xf32, #tpu.memory_space<vmem>>, vector<512x128xf32>
    %cst_8 = arith.constant dense<0.000000e+00> : vector<8x128xf32>
    %9 = tpu.matmul %7, %8, %cst_8 {dimension_numbers = #tpu.dot_dimension_numbers<[1], [0], [0], [1], [0, 0, 1, 1], [], []>} : vector<8x512xf32>, vector<512x128xf32>, vector<8x128xf32> -> vector<8x128xf32>
    %c0_9 = arith.constant 0 : index
    %c0_10 = arith.constant 0 : index
    %10 = vector.load %arg5[%c0_9, %c0_10] : memref<1x128xf32, #tpu.memory_space<vmem>>, vector<1x128xf32>
    %11 = vector.broadcast %10 : vector<1x128xf32> to vector<8x128xf32>
    %12 = arith.addf %9, %11 : vector<8x128xf32>
    %cst_11 = arith.constant 0.000000e+00 : f32
    %13 = vector.broadcast %cst_11 : f32 to vector<8x128xf32>
    %14 = arith.maximumf %12, %13 : vector<8x128xf32>
    %c0_12 = arith.constant 0 : index
    %c0_13 = arith.constant 0 : index
    %15 = vector.load %arg6[%c0_12, %c0_13] : memref<128x128xf32, #tpu.memory_space<vmem>>, vector<128x128xf32>
    %cst_14 = arith.constant dense<0.000000e+00> : vector<8x128xf32>
    %16 = tpu.matmul %14, %15, %cst_14 {dimension_numbers = #tpu.dot_dimension_numbers<[1], [0], [0], [1], [0, 0, 1, 1], [], []>} : vector<8x128xf32>, vector<128x128xf32>, vector<8x128xf32> -> vector<8x128xf32>
    %c0_15 = arith.constant 0 : index
    %c0_16 = arith.constant 0 : index
    %17 = vector.load %arg7[%c0_15, %c0_16] : memref<1x128xf32, #tpu.memory_space<vmem>>, vector<1x128xf32>
    %18 = vector.broadcast %17 : vector<1x128xf32> to vector<8x128xf32>
    %19 = arith.addf %16, %18 : vector<8x128xf32>
    %cst_17 = arith.constant 0.000000e+00 : f32
    %20 = vector.broadcast %cst_17 : f32 to vector<8x128xf32>
    %21 = arith.maximumf %19, %20 : vector<8x128xf32>
    %c0_18 = arith.constant 0 : index
    %c0_19 = arith.constant 0 : index
    %22 = vector.load %arg8[%c0_18, %c0_19] : memref<128x128xf32, #tpu.memory_space<vmem>>, vector<128x128xf32>
    %cst_20 = arith.constant dense<0.000000e+00> : vector<8x128xf32>
    %23 = tpu.matmul %21, %22, %cst_20 {dimension_numbers = #tpu.dot_dimension_numbers<[1], [0], [0], [1], [0, 0, 1, 1], [], []>} : vector<8x128xf32>, vector<128x128xf32>, vector<8x128xf32> -> vector<8x128xf32>
    %c0_21 = arith.constant 0 : index
    %c0_22 = arith.constant 0 : index
    %24 = vector.load %arg9[%c0_21, %c0_22] : memref<1x128xf32, #tpu.memory_space<vmem>>, vector<1x128xf32>
    %25 = vector.broadcast %24 : vector<1x128xf32> to vector<8x128xf32>
    %26 = arith.addf %23, %25 : vector<8x128xf32>
    %cst_23 = arith.constant 0.000000e+00 : f32
    %27 = vector.broadcast %cst_23 : f32 to vector<8x128xf32>
    %28 = arith.maximumf %26, %27 : vector<8x128xf32>
    %c0_24 = arith.constant 0 : index
    %c0_25 = arith.constant 0 : index
    %29 = vector.load %arg10[%c0_24, %c0_25] : memref<8x128xf32, #tpu.memory_space<vmem>>, vector<8x128xf32>
    tpu.vector_store %arg10[%c0_24, %c0_25], %28 {strides = array<i32>} : memref<8x128xf32, #tpu.memory_space<vmem>>, vector<8x128xf32>,
    return
  }
  func.func @transform_0(%arg0: i32) -> (i32, i32) {
    %c0_i32 = arith.constant 0 : i32
    %c0_i32_0 = arith.constant 0 : i32
    return %arg0, %c0_i32 : i32, i32
  }
  func.func @transform_1(%arg0: i32) -> (i32, i32) {
    %c0_i32 = arith.constant 0 : i32
    %c0_i32_0 = arith.constant 0 : i32
    %c0_i32_1 = arith.constant 0 : i32
    return %c0_i32, %c0_i32_0 : i32, i32
  }
  func.func @transform_2(%arg0: i32) -> (i32, i32) {
    %c0_i32 = arith.constant 0 : i32
    %c0_i32_0 = arith.constant 0 : i32
    %c0_i32_1 = arith.constant 0 : i32
    return %c0_i32, %c0_i32_0 : i32, i32
  }
  func.func @transform_3(%arg0: i32) -> (i32, i32) {
    %c0_i32 = arith.constant 0 : i32
    %c0_i32_0 = arith.constant 0 : i32
    %c0_i32_1 = arith.constant 0 : i32
    return %c0_i32, %c0_i32_0 : i32, i32
  }
  func.func @transform_4(%arg0: i32) -> (i32, i32) {
    %c0_i32 = arith.constant 0 : i32
    %c0_i32_0 = arith.constant 0 : i32
    %c0_i32_1 = arith.constant 0 : i32
    return %c0_i32, %c0_i32_0 : i32, i32
  }
  func.func @transform_5(%arg0: i32) -> (i32, i32) {
    %c0_i32 = arith.constant 0 : i32
    %c0_i32_0 = arith.constant 0 : i32
    %c0_i32_1 = arith.constant 0 : i32
    return %c0_i32, %c0_i32_0 : i32, i32
  }
  func.func @transform_6(%arg0: i32) -> (i32, i32) {
    %c0_i32 = arith.constant 0 : i32
    %c0_i32_0 = arith.constant 0 : i32
    %c0_i32_1 = arith.constant 0 : i32
    return %c0_i32, %c0_i32_0 : i32, i32
  }
  func.func @transform_7(%arg0: i32) -> (i32, i32) {
    %c0_i32 = arith.constant 0 : i32
    %c0_i32_0 = arith.constant 0 : i32
    %c0_i32_1 = arith.constant 0 : i32
    return %c0_i32, %c0_i32_0 : i32, i32
  }
  func.func @transform_8(%arg0: i32) -> (i32, i32) {
    %c0_i32 = arith.constant 0 : i32
    %c0_i32_0 = arith.constant 0 : i32
    %c0_i32_1 = arith.constant 0 : i32
    return %c0_i32, %c0_i32_0 : i32, i32
  }
  func.func @transform_9(%arg0: i32) -> (i32, i32) {
    %c0_i32 = arith.constant 0 : i32
    %c0_i32_0 = arith.constant 0 : i32
    return %arg0, %c0_i32 : i32, i32
  }
}

</mosaic_0001>

<llo_original>
// kernel: tpu_custom_call.1
$region0: #{tpu_custom_call.1}
  #allocation0 [shape = 'u32[]', space=smem, size = 0x4, offset = 0x4, fixed_abs, tag = 'smem constant byte address 0x4 - core index']
  #allocation1 [shape = 'u32[144,128]{1,0:T(1,128)}', space=vmem, size = 0x12000, scoped, tag = 'internal scratch']
  %s0 = inlined_call_operand.hbm [shape: f32[8,784], index: 0, kind: input, shape index: {}]
  %s1 = inlined_call_operand.hbm [shape: f32[784,512], index: 1, kind: input, shape index: {}]
  %s2 = inlined_call_operand.hbm [shape: f32[1,512], index: 2, kind: input, shape index: {}]
  %s3 = inlined_call_operand.hbm [shape: f32[512,128], index: 3, kind: input, shape index: {}]
  %s4 = inlined_call_operand.hbm [shape: f32[1,128], index: 4, kind: input, shape index: {}]
  %s5 = inlined_call_operand.hbm [shape: f32[128,128], index: 5, kind: input, shape index: {}]
  %s6 = inlined_call_operand.hbm [shape: f32[1,128], index: 6, kind: input, shape index: {}]
  %s7 = inlined_call_operand.hbm [shape: f32[128,128], index: 7, kind: input, shape index: {}]
  %s8 = inlined_call_operand.hbm [shape: f32[1,128], index: 8, kind: input, shape index: {}]
  %s9 = inlined_call_operand.hbm [shape: f32[8,128], index: 9, kind: output, shape index: {}]
  %s10 = sld [smem:[#allocation0]]
  $region82: #{tpu_custom_call.1} parent=0
    _
  %s12 = ssub.s32 1, %s10
  %s13 = scalar_select 0, %s12, %s10
  $region1: #{tpu_custom_call.1} parent=0
    #allocation2 [shape = 'u8[28672]{0}', space=vmem, size = 0x7000, scoped, tag = 'input window, operand 0, single buffered']
    #allocation3 [shape = 's32[1]{0}', space=sflag, size = 0x4, scoped, tag = 'scoped memory for tpu_custom_call.1']
    #allocation4 [shape = 's32[1]{0}', space=sflag, size = 0x4, scoped, tag = 'scoped memory for tpu_custom_call.1']
    #allocation5 [shape = 'u8[1605632]{0}', space=vmem, size = 0x188000, scoped, tag = 'input window, operand 1, single buffered']
    #allocation6 [shape = 's32[1]{0}', space=sflag, size = 0x4, scoped, tag = 'scoped memory for tpu_custom_call.1']
    #allocation7 [shape = 'u8[2048]{0}', space=vmem, size = 0x800, scoped, tag = 'input window, operand 2, single buffered']
    #allocation8 [shape = 'u8[262144]{0}', space=vmem, size = 0x40000, scoped, tag = 'input window, operand 3, single buffered']
    #allocation9 [shape = 's32[1]{0}', space=sflag, size = 0x4, scoped, tag = 'scoped memory for tpu_custom_call.1']
    #allocation10 [shape = 'u8[512]{0}', space=vmem, size = 0x400, scoped, tag = 'input window, operand 4, single buffered']
    #allocation11 [shape = 'u8[65536]{0}', space=vmem, size = 0x10000, scoped, tag = 'input window, operand 5, single buffered']
    #allocation12 [shape = 's32[1]{0}', space=sflag, size = 0x4, scoped, tag = 'scoped memory for tpu_custom_call.1']
    #allocation13 [shape = 'u8[512]{0}', space=vmem, size = 0x400, scoped, tag = 'input window, operand 6, single buffered']
    #allocation14 [shape = 'u8[65536]{0}', space=vmem, size = 0x10000, scoped, tag = 'input window, operand 7, single buffered']
    #allocation15 [shape = 's32[1]{0}', space=sflag, size = 0x4, scoped, tag = 'scoped memory for tpu_custom_call.1']
    #allocation16 [shape = 'u8[512]{0}', space=vmem, size = 0x400, scoped, tag = 'input window, operand 8, single buffered']
    #allocation17 [shape = 'u8[4096]{0}', space=vmem, size = 0x1000, scoped, tag = 'output window, operand 0, single buffered']
    %14 = vsyncpa [#allocation3], 0
    %15 = vsyncpa [#allocation6], 0
    %16 = vsyncpa [#allocation9], 0
    %17 = vsyncpa [#allocation12], 0
    %18 = vsyncpa [#allocation15], 0
    %19 = vsyncpa [#allocation4], 0
    // Predicated region
    $region2: #{tpu_custom_call.1} parent=1 // pred_check
      _
    $region3: #{tpu_custom_call.1} parent=1 // pred_check_branch
      %21 = sbr.rel (0) target = $region5
    $region4: #{tpu_custom_call.1} parent=1 // pred_region
      %s23 = ssub.s32 896, 896
      %24 = vsyncadd [#allocation3], %s23
      %s26 = sshll.u32 [#allocation2], 4
      %s27 = int_to_ptr.vmem [resolvable:$true] %s26
      %29 = dma.hbm_to_vmem [thread:$0]  %s0, 896, %s27, [#allocation3]
    $region5: #{tpu_custom_call.1} parent=1 // pred_fallthru
      _
    // Predicated region
    $region6: #{tpu_custom_call.1} parent=1 // pred_check
      _
    $region7: #{tpu_custom_call.1} parent=1 // pred_check_branch
      %31 = sbr.rel (0) target = $region9
    $region8: #{tpu_custom_call.1} parent=1 // pred_region
      %s33 = ssub.s32 50176, 50176
      %34 = vsyncadd [#allocation6], %s33
      %s35 = sshll.u32 [#allocation5], 4
      %s36 = int_to_ptr.vmem [resolvable:$true] %s35
      %41 = dma.hbm_to_vmem [thread:$0]  %s1, 50176, %s36, [#allocation6], 512, 512, 32
    $region9: #{tpu_custom_call.1} parent=1 // pred_fallthru
      _
    // Predicated region
    $region10: #{tpu_custom_call.1} parent=1 // pred_check
      _
    $region11: #{tpu_custom_call.1} parent=1 // pred_check_branch
      %43 = sbr.rel (0) target = $region13
    $region12: #{tpu_custom_call.1} parent=1 // pred_region
      %s45 = ssub.s32 64, 64
      %46 = vsyncadd [#allocation6], %s45
      %s48 = sshll.u32 [#allocation7], 4
      %s49 = int_to_ptr.vmem [resolvable:$true] %s48
      %51 = dma.hbm_to_vmem [thread:$0]  %s2, 64, %s49, [#allocation6]
    $region13: #{tpu_custom_call.1} parent=1 // pred_fallthru
      _
    // Predicated region
    $region14: #{tpu_custom_call.1} parent=1 // pred_check
      _
    $region15: #{tpu_custom_call.1} parent=1 // pred_check_branch
      %53 = sbr.rel (0) target = $region17
    $region16: #{tpu_custom_call.1} parent=1 // pred_region
      %s55 = ssub.s32 8192, 8192
      %56 = vsyncadd [#allocation9], %s55
      %s57 = sshll.u32 [#allocation8], 4
      %s58 = int_to_ptr.vmem [resolvable:$true] %s57
      %63 = dma.hbm_to_vmem [thread:$0]  %s3, 8192, %s58, [#allocation9], 128, 128, 8
    $region17: #{tpu_custom_call.1} parent=1 // pred_fallthru
      _
    // Predicated region
    $region18: #{tpu_custom_call.1} parent=1 // pred_check
      _
    $region19: #{tpu_custom_call.1} parent=1 // pred_check_branch
      %65 = sbr.rel (0) target = $region21
    $region20: #{tpu_custom_call.1} parent=1 // pred_region
      %s67 = ssub.s32 16, 16
      %68 = vsyncadd [#allocation9], %s67
      %s70 = sshll.u32 [#allocation10], 4
      %s71 = int_to_ptr.vmem [resolvable:$true] %s70
      %73 = dma.hbm_to_vmem [thread:$0]  %s4, 16, %s71, [#allocation9]
    $region21: #{tpu_custom_call.1} parent=1 // pred_fallthru
      _
    // Predicated region
    $region22: #{tpu_custom_call.1} parent=1 // pred_check
      _
    $region23: #{tpu_custom_call.1} parent=1 // pred_check_branch
      %75 = sbr.rel (0) target = $region25
    $region24: #{tpu_custom_call.1} parent=1 // pred_region
      %s77 = ssub.s32 2048, 2048
      %78 = vsyncadd [#allocation12], %s77
      %s79 = sshll.u32 [#allocation11], 4
      %s80 = int_to_ptr.vmem [resolvable:$true] %s79
      %85 = dma.hbm_to_vmem [thread:$0]  %s5, 2048, %s80, [#allocation12], 128, 128, 8
    $region25: #{tpu_custom_call.1} parent=1 // pred_fallthru
      _
    // Predicated region
    $region26: #{tpu_custom_call.1} parent=1 // pred_check
      _
    $region27: #{tpu_custom_call.1} parent=1 // pred_check_branch
      %87 = sbr.rel (0) target = $region29
    $region28: #{tpu_custom_call.1} parent=1 // pred_region
      %s89 = ssub.s32 16, 16
      %90 = vsyncadd [#allocation12], %s89
      %s92 = sshll.u32 [#allocation13], 4
      %s93 = int_to_ptr.vmem [resolvable:$true] %s92
      %95 = dma.hbm_to_vmem [thread:$0]  %s6, 16, %s93, [#allocation12]
    $region29: #{tpu_custom_call.1} parent=1 // pred_fallthru
      _
    // Predicated region
    $region30: #{tpu_custom_call.1} parent=1 // pred_check
      _
    $region31: #{tpu_custom_call.1} parent=1 // pred_check_branch
      %97 = sbr.rel (0) target = $region33
    $region32: #{tpu_custom_call.1} parent=1 // pred_region
      %s99 = ssub.s32 2048, 2048
      %100 = vsyncadd [#allocation15], %s99
      %s101 = sshll.u32 [#allocation14], 4
      %s102 = int_to_ptr.vmem [resolvable:$true] %s101
      %107 = dma.hbm_to_vmem [thread:$0]  %s7, 2048, %s102, [#allocation15], 128, 128, 8
    $region33: #{tpu_custom_call.1} parent=1 // pred_fallthru
      _
    // Predicated region
    $region34: #{tpu_custom_call.1} parent=1 // pred_check
      _
    $region35: #{tpu_custom_call.1} parent=1 // pred_check_branch
      %109 = sbr.rel (0) target = $region37
    $region36: #{tpu_custom_call.1} parent=1 // pred_region
      %s111 = ssub.s32 16, 16
      %112 = vsyncadd [#allocation15], %s111
      %s114 = sshll.u32 [#allocation16], 4
      %s115 = int_to_ptr.vmem [resolvable:$true] %s114
      %117 = dma.hbm_to_vmem [thread:$0]  %s8, 16, %s115, [#allocation15]
    $region37: #{tpu_custom_call.1} parent=1 // pred_fallthru
      _
    // Predicated region
    $region38: #{tpu_custom_call.1} parent=1 // pred_check
      _
    $region39: #{tpu_custom_call.1} parent=1 // pred_check_branch
      %119 = sbr.rel (0) target = $region41
    $region40: #{tpu_custom_call.1} parent=1 // pred_region
      %120 = dma.done [#allocation3], 896
    $region41: #{tpu_custom_call.1} parent=1 // pred_fallthru
      _
    // Predicated region
    $region42: #{tpu_custom_call.1} parent=1 // pred_check
      _
    $region43: #{tpu_custom_call.1} parent=1 // pred_check_branch
      %122 = sbr.rel (0) target = $region45
    $region44: #{tpu_custom_call.1} parent=1 // pred_region
      %123 = dma.done [#allocation6], 50176
    $region45: #{tpu_custom_call.1} parent=1 // pred_fallthru
      _
    // Predicated region
    $region46: #{tpu_custom_call.1} parent=1 // pred_check
      _
    $region47: #{tpu_custom_call.1} parent=1 // pred_check_branch
      %125 = sbr.rel (0) target = $region49
    $region48: #{tpu_custom_call.1} parent=1 // pred_region
      %126 = dma.done [#allocation6], 64
    $region49: #{tpu_custom_call.1} parent=1 // pred_fallthru
      _
    // Predicated region
    $region50: #{tpu_custom_call.1} parent=1 // pred_check
      _
    $region51: #{tpu_custom_call.1} parent=1 // pred_check_branch
      %128 = sbr.rel (0) target = $region53
    $region52: #{tpu_custom_call.1} parent=1 // pred_region
      %129 = dma.done [#allocation9], 8192
    $region53: #{tpu_custom_call.1} parent=1 // pred_fallthru
      _
    // Predicated region
    $region54: #{tpu_custom_call.1} parent=1 // pred_check
      _
    $region55: #{tpu_custom_call.1} parent=1 // pred_check_branch
      %131 = sbr.rel (0) target = $region57
    $region56: #{tpu_custom_call.1} parent=1 // pred_region
      %132 = dma.done [#allocation9], 16
    $region57: #{tpu_custom_call.1} parent=1 // pred_fallthru
      _
    // Predicated region
    $region58: #{tpu_custom_call.1} parent=1 // pred_check
      _
    $region59: #{tpu_custom_call.1} parent=1 // pred_check_branch
      %134 = sbr.rel (0) target = $region61
    $region60: #{tpu_custom_call.1} parent=1 // pred_region
      %135 = dma.done [#allocation12], 2048
    $region61: #{tpu_custom_call.1} parent=1 // pred_fallthru
      _
    // Predicated region
    $region62: #{tpu_custom_call.1} parent=1 // pred_check
      _
    $region63: #{tpu_custom_call.1} parent=1 // pred_check_branch
      %137 = sbr.rel (0) target = $region65
    $region64: #{tpu_custom_call.1} parent=1 // pred_region
      %138 = dma.done [#allocation12], 16
    $region65: #{tpu_custom_call.1} parent=1 // pred_fallthru
      _
    // Predicated region
    $region66: #{tpu_custom_call.1} parent=1 // pred_check
      _
    $region67: #{tpu_custom_call.1} parent=1 // pred_check_branch
      %140 = sbr.rel (0) target = $region69
    $region68: #{tpu_custom_call.1} parent=1 // pred_region
      %141 = dma.done [#allocation15], 2048
    $region69: #{tpu_custom_call.1} parent=1 // pred_fallthru
      _
    // Predicated region
    $region70: #{tpu_custom_call.1} parent=1 // pred_check
      _
    $region71: #{tpu_custom_call.1} parent=1 // pred_check_branch
      %143 = sbr.rel (0) target = $region73
    $region72: #{tpu_custom_call.1} parent=1 // pred_region
      %144 = dma.done [#allocation15], 16
    $region73: #{tpu_custom_call.1} parent=1 // pred_fallthru
      _
    %v145 = vld [vmem:[#allocation2] sm:$0xff]
    %v146 = vld [vmem:[#allocation2 + $0x8] sm:$0xff]
    %v147 = vld [vmem:[#allocation2 + $0x10] sm:$0xff]
    %v148 = vld [vmem:[#allocation2 + $0x18] sm:$0xff]
    %v149 = vld [vmem:[#allocation2 + $0x20] sm:$0xff]
    %v150 = vld [vmem:[#allocation2 + $0x28] sm:$0xff]
    %v151 = vld [vmem:[#allocation2 + $0x30] sm:$0xff]
    %v152 = vld [vmem:[#allocation5] sm:$0xff]
    %v153 = vld [vmem:[#allocation5 + $0x8] sm:$0xff]
    %v154 = vld [vmem:[#allocation5 + $0x10] sm:$0xff]
    %v155 = vld [vmem:[#allocation5 + $0x18] sm:$0xff]
    %v156 = vld [vmem:[#allocation5 + $0x20] sm:$0xff]
    %v157 = vld [vmem:[#allocation5 + $0x28] sm:$0xff]
    %v158 = vld [vmem:[#allocation5 + $0x30] sm:$0xff]
    %v159 = vld [vmem:[#allocation5 + $0x38] sm:$0xff]
    %v160 = vld [vmem:[#allocation5 + $0x40] sm:$0xff]
    %v161 = vld [vmem:[#allocation5 + $0x48] sm:$0xff]
    %v162 = vld [vmem:[#allocation5 + $0x50] sm:$0xff]
    %v163 = vld [vmem:[#allocation5 + $0x58] sm:$0xff]
    %v164 = vld [vmem:[#allocation5 + $0x60] sm:$0xff]
    %v165 = vld [vmem:[#allocation5 + $0x68] sm:$0xff]
    %v166 = vld [vmem:[#allocation5 + $0x70] sm:$0xff]
    %v167 = vld [vmem:[#allocation5 + $0x78] sm:$0xff]
    %v168 = vld [vmem:[#allocation5 + $0x80] sm:$0xff]
    %v169 = vld [vmem:[#allocation5 + $0x88] sm:$0xff]
    %v170 = vld [vmem:[#allocation5 + $0x90] sm:$0xff]
    %v171 = vld [vmem:[#allocation5 + $0x98] sm:$0xff]
    %v172 = vld [vmem:[#allocation5 + $0xa0] sm:$0xff]
    %v173 = vld [vmem:[#allocation5 + $0xa8] sm:$0xff]
    %v174 = vld [vmem:[#allocation5 + $0xb0] sm:$0xff]
    %v175 = vld [vmem:[#allocation5 + $0xb8] sm:$0xff]
    %v176 = vld [vmem:[#allocation5 + $0xc0] sm:$0xff]
    %v177 = vld [vmem:[#allocation5 + $0xc8] sm:$0xff]
    %v178 = vld [vmem:[#allocation5 + $0xd0] sm:$0xff]
    %v179 = vld [vmem:[#allocation5 + $0xd8] sm:$0xff]
    %v180 = vld [vmem:[#allocation5 + $0xe0] sm:$0xff]
    %v181 = vld [vmem:[#allocation5 + $0xe8] sm:$0xff]
    %v182 = vld [vmem:[#allocation5 + $0xf0] sm:$0xff]
    %v183 = vld [vmem:[#allocation5 + $0xf8] sm:$0xff]
    %v184 = vld [vmem:[#allocation5 + $0x100] sm:$0xff]
    %v185 = vld [vmem:[#allocation5 + $0x108] sm:$0xff]
    %v186 = vld [vmem:[#allocation5 + $0x110] sm:$0xff]
    %v187 = vld [vmem:[#allocation5 + $0x118] sm:$0xff]
    %v188 = vld [vmem:[#allocation5 + $0x120] sm:$0xff]
    %v189 = vld [vmem:[#allocation5 + $0x128] sm:$0xff]
    %v190 = vld [vmem:[#allocation5 + $0x130] sm:$0xff]
    %v191 = vld [vmem:[#allocation5 + $0x138] sm:$0xff]
    %v192 = vld [vmem:[#allocation5 + $0x140] sm:$0xff]
    %v193 = vld [vmem:[#allocation5 + $0x148] sm:$0xff]
    %v194 = vld [vmem:[#allocation5 + $0x150] sm:$0xff]
    %v195 = vld [vmem:[#allocation5 + $0x158] sm:$0xff]
    %v196 = vld [vmem:[#allocation5 + $0x160] sm:$0xff]
    %v197 = vld [vmem:[#allocation5 + $0x168] sm:$0xff]
    %v198 = vld [vmem:[#allocation5 + $0x170] sm:$0xff]
    %v199 = vld [vmem:[#allocation5 + $0x178] sm:$0xff]
    %v200 = vld [vmem:[#allocation5 + $0x180] sm:$0xff]
    %v201 = vld [vmem:[#allocation5 + $0x188] sm:$0xff]
    %v202 = vld [vmem:[#allocation5 + $0x190] sm:$0xff]
    %v203 = vld [vmem:[#allocation5 + $0x198] sm:$0xff]
    %v204 = vld [vmem:[#allocation5 + $0x1a0] sm:$0xff]
    %v205 = vld [vmem:[#allocation5 + $0x1a8] sm:$0xff]
    %v206 = vld [vmem:[#allocation5 + $0x1b0] sm:$0xff]
    %v207 = vld [vmem:[#allocation5 + $0x1b8] sm:$0xff]
    %v208 = vld [vmem:[#allocation5 + $0x1c0] sm:$0xff]
    %v209 = vld [vmem:[#allocation5 + $0x1c8] sm:$0xff]
    %v210 = vld [vmem:[#allocation5 + $0x1d0] sm:$0xff]
    %v211 = vld [vmem:[#allocation5 + $0x1d8] sm:$0xff]
    %v212 = vld [vmem:[#allocation5 + $0x1e0] sm:$0xff]
    %v213 = vld [vmem:[#allocation5 + $0x1e8] sm:$0xff]
    %v214 = vld [vmem:[#allocation5 + $0x1f0] sm:$0xff]
    %v215 = vld [vmem:[#allocation5 + $0x1f8] sm:$0xff]
    %v216 = vld [vmem:[#allocation5 + $0x200] sm:$0xff]
    %v217 = vld [vmem:[#allocation5 + $0x208] sm:$0xff]
    %v218 = vld [vmem:[#allocation5 + $0x210] sm:$0xff]
    %v219 = vld [vmem:[#allocation5 + $0x218] sm:$0xff]
    %v220 = vld [vmem:[#allocation5 + $0x220] sm:$0xff]
    %v221 = vld [vmem:[#allocation5 + $0x228] sm:$0xff]
    %v222 = vld [vmem:[#allocation5 + $0x230] sm:$0xff]
    %v223 = vld [vmem:[#allocation5 + $0x238] sm:$0xff]
    %v224 = vld [vmem:[#allocation5 + $0x240] sm:$0xff]
    %v225 = vld [vmem:[#allocation5 + $0x248] sm:$0xff]
    %v226 = vld [vmem:[#allocation5 + $0x250] sm:$0xff]
    %v227 = vld [vmem:[#allocation5 + $0x258] sm:$0xff]
    %v228 = vld [vmem:[#allocation5 + $0x260] sm:$0xff]
    %v229 = vld [vmem:[#allocation5 + $0x268] sm:$0xff]
    %v230 = vld [vmem:[#allocation5 + $0x270] sm:$0xff]
    %v231 = vld [vmem:[#allocation5 + $0x278] sm:$0xff]
    %v232 = vld [vmem:[#allocation5 + $0x280] sm:$0xff]
    %v233 = vld [vmem:[#allocation5 + $0x288] sm:$0xff]
    %v234 = vld [vmem:[#allocation5 + $0x290] sm:$0xff]
    %v235 = vld [vmem:[#allocation5 + $0x298] sm:$0xff]
    %v236 = vld [vmem:[#allocation5 + $0x2a0] sm:$0xff]
    %v237 = vld [vmem:[#allocation5 + $0x2a8] sm:$0xff]
    %v238 = vld [vmem:[#allocation5 + $0x2b0] sm:$0xff]
    %v239 = vld [vmem:[#allocation5 + $0x2b8] sm:$0xff]
    %v240 = vld [vmem:[#allocation5 + $0x2c0] sm:$0xff]
    %v241 = vld [vmem:[#allocation5 + $0x2c8] sm:$0xff]
    %v242 = vld [vmem:[#allocation5 + $0x2d0] sm:$0xff]
    %v243 = vld [vmem:[#allocation5 + $0x2d8] sm:$0xff]
    %v244 = vld [vmem:[#allocation5 + $0x2e0] sm:$0xff]
    %v245 = vld [vmem:[#allocation5 + $0x2e8] sm:$0xff]
    %v246 = vld [vmem:[#allocation5 + $0x2f0] sm:$0xff]
    %v247 = vld [vmem:[#allocation5 + $0x2f8] sm:$0xff]
    %v248 = vld [vmem:[#allocation5 + $0x300] sm:$0xff]
    %v249 = vld [vmem:[#allocation5 + $0x308] sm:$0xff]
    %v250 = vld [vmem:[#allocation5 + $0x310] sm:$0xff]
    %v251 = vld [vmem:[#allocation5 + $0x318] sm:$0xff]
    %v252 = vld [vmem:[#allocation5 + $0x320] sm:$0xff]
    %v253 = vld [vmem:[#allocation5 + $0x328] sm:$0xff]
    %v254 = vld [vmem:[#allocation5 + $0x330] sm:$0xff]
    %v255 = vld [vmem:[#allocation5 + $0x338] sm:$0xff]
    %v256 = vld [vmem:[#allocation5 + $0x340] sm:$0xff]
    %v257 = vld [vmem:[#allocation5 + $0x348] sm:$0xff]
    %v258 = vld [vmem:[#allocation5 + $0x350] sm:$0xff]
    %v259 = vld [vmem:[#allocation5 + $0x358] sm:$0xff]
    %v260 = vld [vmem:[#allocation5 + $0x360] sm:$0xff]
    %v261 = vld [vmem:[#allocation5 + $0x368] sm:$0xff]
    %v262 = vld [vmem:[#allocation5 + $0x370] sm:$0xff]
    %v263 = vld [vmem:[#allocation5 + $0x378] sm:$0xff]
    %v264 = vld [vmem:[#allocation5 + $0x380] sm:$0xff]
    %v265 = vld [vmem:[#allocation5 + $0x388] sm:$0xff]
    %v266 = vld [vmem:[#allocation5 + $0x390] sm:$0xff]
    %v267 = vld [vmem:[#allocation5 + $0x398] sm:$0xff]
    %v268 = vld [vmem:[#allocation5 + $0x3a0] sm:$0xff]
    %v269 = vld [vmem:[#allocation5 + $0x3a8] sm:$0xff]
    %v270 = vld [vmem:[#allocation5 + $0x3b0] sm:$0xff]
    %v271 = vld [vmem:[#allocation5 + $0x3b8] sm:$0xff]
    %v272 = vld [vmem:[#allocation5 + $0x3c0] sm:$0xff]
    %v273 = vld [vmem:[#allocation5 + $0x3c8] sm:$0xff]
    %v274 = vld [vmem:[#allocation5 + $0x3d0] sm:$0xff]
    %v275 = vld [vmem:[#allocation5 + $0x3d8] sm:$0xff]
    %v276 = vld [vmem:[#allocation5 + $0x3e0] sm:$0xff]
    %v277 = vld [vmem:[#allocation5 + $0x3e8] sm:$0xff]
    %v278 = vld [vmem:[#allocation5 + $0x3f0] sm:$0xff]
    %v279 = vld [vmem:[#allocation5 + $0x3f8] sm:$0xff]
    %v280 = vld [vmem:[#allocation5 + $0x400] sm:$0xff]
    %v281 = vld [vmem:[#allocation5 + $0x408] sm:$0xff]
    %v282 = vld [vmem:[#allocation5 + $0x410] sm:$0xff]
    %v283 = vld [vmem:[#allocation5 + $0x418] sm:$0xff]
    %v284 = vld [vmem:[#allocation5 + $0x420] sm:$0xff]
    %v285 = vld [vmem:[#allocation5 + $0x428] sm:$0xff]
    %v286 = vld [vmem:[#allocation5 + $0x430] sm:$0xff]
    %v287 = vld [vmem:[#allocation5 + $0x438] sm:$0xff]
    %v288 = vld [vmem:[#allocation5 + $0x440] sm:$0xff]
    %v289 = vld [vmem:[#allocation5 + $0x448] sm:$0xff]
    %v290 = vld [vmem:[#allocation5 + $0x450] sm:$0xff]
    %v291 = vld [vmem:[#allocation5 + $0x458] sm:$0xff]
    %v292 = vld [vmem:[#allocation5 + $0x460] sm:$0xff]
    %v293 = vld [vmem:[#allocation5 + $0x468] sm:$0xff]
    %v294 = vld [vmem:[#allocation5 + $0x470] sm:$0xff]
    %v295 = vld [vmem:[#allocation5 + $0x478] sm:$0xff]
    %v296 = vld [vmem:[#allocation5 + $0x480] sm:$0xff]
    %v297 = vld [vmem:[#allocation5 + $0x488] sm:$0xff]
    %v298 = vld [vmem:[#allocation5 + $0x490] sm:$0xff]
    %v299 = vld [vmem:[#allocation5 + $0x498] sm:$0xff]
    %v300 = vld [vmem:[#allocation5 + $0x4a0] sm:$0xff]
    %v301 = vld [vmem:[#allocation5 + $0x4a8] sm:$0xff]
    %v302 = vld [vmem:[#allocation5 + $0x4b0] sm:$0xff]
    %v303 = vld [vmem:[#allocation5 + $0x4b8] sm:$0xff]
    %v304 = vld [vmem:[#allocation5 + $0x4c0] sm:$0xff]
    %v305 = vld [vmem:[#allocation5 + $0x4c8] sm:$0xff]
    %v306 = vld [vmem:[#allocation5 + $0x4d0] sm:$0xff]
    %v307 = vld [vmem:[#allocation5 + $0x4d8] sm:$0xff]
    %v308 = vld [vmem:[#allocation5 + $0x4e0] sm:$0xff]
    %v309 = vld [vmem:[#allocation5 + $0x4e8] sm:$0xff]
    %v310 = vld [vmem:[#allocation5 + $0x4f0] sm:$0xff]
    %v311 = vld [vmem:[#allocation5 + $0x4f8] sm:$0xff]
    %v312 = vld [vmem:[#allocation5 + $0x500] sm:$0xff]
    %v313 = vld [vmem:[#allocation5 + $0x508] sm:$0xff]
    %v314 = vld [vmem:[#allocation5 + $0x510] sm:$0xff]
    %v315 = vld [vmem:[#allocation5 + $0x518] sm:$0xff]
    %v316 = vld [vmem:[#allocation5 + $0x520] sm:$0xff]
    %v317 = vld [vmem:[#allocation5 + $0x528] sm:$0xff]
    %v318 = vld [vmem:[#allocation5 + $0x530] sm:$0xff]
    %v319 = vld [vmem:[#allocation5 + $0x538] sm:$0xff]
    %v320 = vld [vmem:[#allocation5 + $0x540] sm:$0xff]
    %v321 = vld [vmem:[#allocation5 + $0x548] sm:$0xff]
    %v322 = vld [vmem:[#allocation5 + $0x550] sm:$0xff]
    %v323 = vld [vmem:[#allocation5 + $0x558] sm:$0xff]
    %v324 = vld [vmem:[#allocation5 + $0x560] sm:$0xff]
    %v325 = vld [vmem:[#allocation5 + $0x568] sm:$0xff]
    %v326 = vld [vmem:[#allocation5 + $0x570] sm:$0xff]
    %v327 = vld [vmem:[#allocation5 + $0x578] sm:$0xff]
    %v328 = vld [vmem:[#allocation5 + $0x580] sm:$0xff]
    %v329 = vld [vmem:[#allocation5 + $0x588] sm:$0xff]
    %v330 = vld [vmem:[#allocation5 + $0x590] sm:$0xff]
    %v331 = vld [vmem:[#allocation5 + $0x598] sm:$0xff]
    %v332 = vld [vmem:[#allocation5 + $0x5a0] sm:$0xff]
    %v333 = vld [vmem:[#allocation5 + $0x5a8] sm:$0xff]
    %v334 = vld [vmem:[#allocation5 + $0x5b0] sm:$0xff]
    %v335 = vld [vmem:[#allocation5 + $0x5b8] sm:$0xff]
    %v336 = vld [vmem:[#allocation5 + $0x5c0] sm:$0xff]
    %v337 = vld [vmem:[#allocation5 + $0x5c8] sm:$0xff]
    %v338 = vld [vmem:[#allocation5 + $0x5d0] sm:$0xff]
    %v339 = vld [vmem:[#allocation5 + $0x5d8] sm:$0xff]
    %v340 = vld [vmem:[#allocation5 + $0x5e0] sm:$0xff]
    %v341 = vld [vmem:[#allocation5 + $0x5e8] sm:$0xff]
    %v342 = vld [vmem:[#allocation5 + $0x5f0] sm:$0xff]
    %v343 = vld [vmem:[#allocation5 + $0x5f8] sm:$0xff]
    %v344 = vld [vmem:[#allocation5 + $0x600] sm:$0xff]
    %v345 = vld [vmem:[#allocation5 + $0x608] sm:$0xff]
    %v346 = vld [vmem:[#allocation5 + $0x610] sm:$0xff]
    %v347 = vld [vmem:[#allocation5 + $0x618] sm:$0xff]
    %v348 = vld [vmem:[#allocation5 + $0x620] sm:$0xff]
    %v349 = vld [vmem:[#allocation5 + $0x628] sm:$0xff]
    %v350 = vld [vmem:[#allocation5 + $0x630] sm:$0xff]
    %v351 = vld [vmem:[#allocation5 + $0x638] sm:$0xff]
    %v352 = vld [vmem:[#allocation5 + $0x640] sm:$0xff]
    %v353 = vld [vmem:[#allocation5 + $0x648] sm:$0xff]
    %v354 = vld [vmem:[#allocation5 + $0x650] sm:$0xff]
    %v355 = vld [vmem:[#allocation5 + $0x658] sm:$0xff]
    %v356 = vld [vmem:[#allocation5 + $0x660] sm:$0xff]
    %v357 = vld [vmem:[#allocation5 + $0x668] sm:$0xff]
    %v358 = vld [vmem:[#allocation5 + $0x670] sm:$0xff]
    %v359 = vld [vmem:[#allocation5 + $0x678] sm:$0xff]
    %v360 = vld [vmem:[#allocation5 + $0x680] sm:$0xff]
    %v361 = vld [vmem:[#allocation5 + $0x688] sm:$0xff]
    %v362 = vld [vmem:[#allocation5 + $0x690] sm:$0xff]
    %v363 = vld [vmem:[#allocation5 + $0x698] sm:$0xff]
    %v364 = vld [vmem:[#allocation5 + $0x6a0] sm:$0xff]
    %v365 = vld [vmem:[#allocation5 + $0x6a8] sm:$0xff]
    %v366 = vld [vmem:[#allocation5 + $0x6b0] sm:$0xff]
    %v367 = vld [vmem:[#allocation5 + $0x6b8] sm:$0xff]
    %v368 = vld [vmem:[#allocation5 + $0x6c0] sm:$0xff]
    %v369 = vld [vmem:[#allocation5 + $0x6c8] sm:$0xff]
    %v370 = vld [vmem:[#allocation5 + $0x6d0] sm:$0xff]
    %v371 = vld [vmem:[#allocation5 + $0x6d8] sm:$0xff]
    %v372 = vld [vmem:[#allocation5 + $0x6e0] sm:$0xff]
    %v373 = vld [vmem:[#allocation5 + $0x6e8] sm:$0xff]
    %v374 = vld [vmem:[#allocation5 + $0x6f0] sm:$0xff]
    %v375 = vld [vmem:[#allocation5 + $0x6f8] sm:$0xff]
    %v376 = vld [vmem:[#allocation5 + $0x700] sm:$0xff]
    %v377 = vld [vmem:[#allocation5 + $0x708] sm:$0xff]
    %v378 = vld [vmem:[#allocation5 + $0x710] sm:$0xff]
    %v379 = vld [vmem:[#allocation5 + $0x718] sm:$0xff]
    %v380 = vld [vmem:[#allocation5 + $0x720] sm:$0xff]
    %v381 = vld [vmem:[#allocation5 + $0x728] sm:$0xff]
    %v382 = vld [vmem:[#allocation5 + $0x730] sm:$0xff]
    %v383 = vld [vmem:[#allocation5 + $0x738] sm:$0xff]
    %v384 = vld [vmem:[#allocation5 + $0x740] sm:$0xff]
    %v385 = vld [vmem:[#allocation5 + $0x748] sm:$0xff]
    %v386 = vld [vmem:[#allocation5 + $0x750] sm:$0xff]
    %v387 = vld [vmem:[#allocation5 + $0x758] sm:$0xff]
    %v388 = vld [vmem:[#allocation5 + $0x760] sm:$0xff]
    %v389 = vld [vmem:[#allocation5 + $0x768] sm:$0xff]
    %v390 = vld [vmem:[#allocation5 + $0x770] sm:$0xff]
    %v391 = vld [vmem:[#allocation5 + $0x778] sm:$0xff]
    %v392 = vld [vmem:[#allocation5 + $0x780] sm:$0xff]
    %v393 = vld [vmem:[#allocation5 + $0x788] sm:$0xff]
    %v394 = vld [vmem:[#allocation5 + $0x790] sm:$0xff]
    %v395 = vld [vmem:[#allocation5 + $0x798] sm:$0xff]
    %v396 = vld [vmem:[#allocation5 + $0x7a0] sm:$0xff]
    %v397 = vld [vmem:[#allocation5 + $0x7a8] sm:$0xff]
    %v398 = vld [vmem:[#allocation5 + $0x7b0] sm:$0xff]
    %v399 = vld [vmem:[#allocation5 + $0x7b8] sm:$0xff]
    %v400 = vld [vmem:[#allocation5 + $0x7c0] sm:$0xff]
    %v401 = vld [vmem:[#allocation5 + $0x7c8] sm:$0xff]
    %v402 = vld [vmem:[#allocation5 + $0x7d0] sm:$0xff]
    %v403 = vld [vmem:[#allocation5 + $0x7d8] sm:$0xff]
    %v404 = vld [vmem:[#allocation5 + $0x7e0] sm:$0xff]
    %v405 = vld [vmem:[#allocation5 + $0x7e8] sm:$0xff]
    %v406 = vld [vmem:[#allocation5 + $0x7f0] sm:$0xff]
    %v407 = vld [vmem:[#allocation5 + $0x7f8] sm:$0xff]
    %v408 = vld [vmem:[#allocation5 + $0x800] sm:$0xff]
    %v409 = vld [vmem:[#allocation5 + $0x808] sm:$0xff]
    %v410 = vld [vmem:[#allocation5 + $0x810] sm:$0xff]
    %v411 = vld [vmem:[#allocation5 + $0x818] sm:$0xff]
    %v412 = vld [vmem:[#allocation5 + $0x820] sm:$0xff]
    %v413 = vld [vmem:[#allocation5 + $0x828] sm:$0xff]
    %v414 = vld [vmem:[#allocation5 + $0x830] sm:$0xff]
    %v415 = vld [vmem:[#allocation5 + $0x838] sm:$0xff]
    %v416 = vld [vmem:[#allocation5 + $0x840] sm:$0xff]
    %v417 = vld [vmem:[#allocation5 + $0x848] sm:$0xff]
    %v418 = vld [vmem:[#allocation5 + $0x850] sm:$0xff]
    %v419 = vld [vmem:[#allocation5 + $0x858] sm:$0xff]
    %v420 = vld [vmem:[#allocation5 + $0x860] sm:$0xff]
    %v421 = vld [vmem:[#allocation5 + $0x868] sm:$0xff]
    %v422 = vld [vmem:[#allocation5 + $0x870] sm:$0xff]
    %v423 = vld [vmem:[#allocation5 + $0x878] sm:$0xff]
    %v424 = vld [vmem:[#allocation5 + $0x880] sm:$0xff]
    %v425 = vld [vmem:[#allocation5 + $0x888] sm:$0xff]
    %v426 = vld [vmem:[#allocation5 + $0x890] sm:$0xff]
    %v427 = vld [vmem:[#allocation5 + $0x898] sm:$0xff]
    %v428 = vld [vmem:[#allocation5 + $0x8a0] sm:$0xff]
    %v429 = vld [vmem:[#allocation5 + $0x8a8] sm:$0xff]
    %v430 = vld [vmem:[#allocation5 + $0x8b0] sm:$0xff]
    %v431 = vld [vmem:[#allocation5 + $0x8b8] sm:$0xff]
    %v432 = vld [vmem:[#allocation5 + $0x8c0] sm:$0xff]
    %v433 = vld [vmem:[#allocation5 + $0x8c8] sm:$0xff]
    %v434 = vld [vmem:[#allocation5 + $0x8d0] sm:$0xff]
    %v435 = vld [vmem:[#allocation5 + $0x8d8] sm:$0xff]
    %v436 = vld [vmem:[#allocation5 + $0x8e0] sm:$0xff]
    %v437 = vld [vmem:[#allocation5 + $0x8e8] sm:$0xff]
    %v438 = vld [vmem:[#allocation5 + $0x8f0] sm:$0xff]
    %v439 = vld [vmem:[#allocation5 + $0x8f8] sm:$0xff]
    %v440 = vld [vmem:[#allocation5 + $0x900] sm:$0xff]
    %v441 = vld [vmem:[#allocation5 + $0x908] sm:$0xff]
    %v442 = vld [vmem:[#allocation5 + $0x910] sm:$0xff]
    %v443 = vld [vmem:[#allocation5 + $0x918] sm:$0xff]
    %v444 = vld [vmem:[#allocation5 + $0x920] sm:$0xff]
    %v445 = vld [vmem:[#allocation5 + $0x928] sm:$0xff]
    %v446 = vld [vmem:[#allocation5 + $0x930] sm:$0xff]
    %v447 = vld [vmem:[#allocation5 + $0x938] sm:$0xff]
    %v448 = vld [vmem:[#allocation5 + $0x940] sm:$0xff]
    %v449 = vld [vmem:[#allocation5 + $0x948] sm:$0xff]
    %v450 = vld [vmem:[#allocation5 + $0x950] sm:$0xff]
    %v451 = vld [vmem:[#allocation5 + $0x958] sm:$0xff]
    %v452 = vld [vmem:[#allocation5 + $0x960] sm:$0xff]
    %v453 = vld [vmem:[#allocation5 + $0x968] sm:$0xff]
    %v454 = vld [vmem:[#allocation5 + $0x970] sm:$0xff]
    %v455 = vld [vmem:[#allocation5 + $0x978] sm:$0xff]
    %v456 = vld [vmem:[#allocation5 + $0x980] sm:$0xff]
    %v457 = vld [vmem:[#allocation5 + $0x988] sm:$0xff]
    %v458 = vld [vmem:[#allocation5 + $0x990] sm:$0xff]
    %v459 = vld [vmem:[#allocation5 + $0x998] sm:$0xff]
    %v460 = vld [vmem:[#allocation5 + $0x9a0] sm:$0xff]
    %v461 = vld [vmem:[#allocation5 + $0x9a8] sm:$0xff]
    %v462 = vld [vmem:[#allocation5 + $0x9b0] sm:$0xff]
    %v463 = vld [vmem:[#allocation5 + $0x9b8] sm:$0xff]
    %v464 = vld [vmem:[#allocation5 + $0x9c0] sm:$0xff]
    %v465 = vld [vmem:[#allocation5 + $0x9c8] sm:$0xff]
    %v466 = vld [vmem:[#allocation5 + $0x9d0] sm:$0xff]
    %v467 = vld [vmem:[#allocation5 + $0x9d8] sm:$0xff]
    %v468 = vld [vmem:[#allocation5 + $0x9e0] sm:$0xff]
    %v469 = vld [vmem:[#allocation5 + $0x9e8] sm:$0xff]
    %v470 = vld [vmem:[#allocation5 + $0x9f0] sm:$0xff]
    %v471 = vld [vmem:[#allocation5 + $0x9f8] sm:$0xff]
    %v472 = vld [vmem:[#allocation5 + $0xa00] sm:$0xff]
    %v473 = vld [vmem:[#allocation5 + $0xa08] sm:$0xff]
    %v474 = vld [vmem:[#allocation5 + $0xa10] sm:$0xff]
    %v475 = vld [vmem:[#allocation5 + $0xa18] sm:$0xff]
    %v476 = vld [vmem:[#allocation5 + $0xa20] sm:$0xff]
    %v477 = vld [vmem:[#allocation5 + $0xa28] sm:$0xff]
    %v478 = vld [vmem:[#allocation5 + $0xa30] sm:$0xff]
    %v479 = vld [vmem:[#allocation5 + $0xa38] sm:$0xff]
    %v480 = vld [vmem:[#allocation5 + $0xa40] sm:$0xff]
    %v481 = vld [vmem:[#allocation5 + $0xa48] sm:$0xff]
    %v482 = vld [vmem:[#allocation5 + $0xa50] sm:$0xff]
    %v483 = vld [vmem:[#allocation5 + $0xa58] sm:$0xff]
    %v484 = vld [vmem:[#allocation5 + $0xa60] sm:$0xff]
    %v485 = vld [vmem:[#allocation5 + $0xa68] sm:$0xff]
    %v486 = vld [vmem:[#allocation5 + $0xa70] sm:$0xff]
    %v487 = vld [vmem:[#allocation5 + $0xa78] sm:$0xff]
    %v488 = vld [vmem:[#allocation5 + $0xa80] sm:$0xff]
    %v489 = vld [vmem:[#allocation5 + $0xa88] sm:$0xff]
    %v490 = vld [vmem:[#allocation5 + $0xa90] sm:$0xff]
    %v491 = vld [vmem:[#allocation5 + $0xa98] sm:$0xff]
    %v492 = vld [vmem:[#allocation5 + $0xaa0] sm:$0xff]
    %v493 = vld [vmem:[#allocation5 + $0xaa8] sm:$0xff]
    %v494 = vld [vmem:[#allocation5 + $0xab0] sm:$0xff]
    %v495 = vld [vmem:[#allocation5 + $0xab8] sm:$0xff]
    %v496 = vld [vmem:[#allocation5 + $0xac0] sm:$0xff]
    %v497 = vld [vmem:[#allocation5 + $0xac8] sm:$0xff]
    %v498 = vld [vmem:[#allocation5 + $0xad0] sm:$0xff]
    %v499 = vld [vmem:[#allocation5 + $0xad8] sm:$0xff]
    %v500 = vld [vmem:[#allocation5 + $0xae0] sm:$0xff]
    %v501 = vld [vmem:[#allocation5 + $0xae8] sm:$0xff]
    %v502 = vld [vmem:[#allocation5 + $0xaf0] sm:$0xff]
    %v503 = vld [vmem:[#allocation5 + $0xaf8] sm:$0xff]
    %v504 = vld [vmem:[#allocation5 + $0xb00] sm:$0xff]
    %v505 = vld [vmem:[#allocation5 + $0xb08] sm:$0xff]
    %v506 = vld [vmem:[#allocation5 + $0xb10] sm:$0xff]
    %v507 = vld [vmem:[#allocation5 + $0xb18] sm:$0xff]
    %v508 = vld [vmem:[#allocation5 + $0xb20] sm:$0xff]
    %v509 = vld [vmem:[#allocation5 + $0xb28] sm:$0xff]
    %v510 = vld [vmem:[#allocation5 + $0xb30] sm:$0xff]
    %v511 = vld [vmem:[#allocation5 + $0xb38] sm:$0xff]
    %v512 = vld [vmem:[#allocation5 + $0xb40] sm:$0xff]
    %v513 = vld [vmem:[#allocation5 + $0xb48] sm:$0xff]
    %v514 = vld [vmem:[#allocation5 + $0xb50] sm:$0xff]
    %v515 = vld [vmem:[#allocation5 + $0xb58] sm:$0xff]
    %v516 = vld [vmem:[#allocation5 + $0xb60] sm:$0xff]
    %v517 = vld [vmem:[#allocation5 + $0xb68] sm:$0xff]
    %v518 = vld [vmem:[#allocation5 + $0xb70] sm:$0xff]
    %v519 = vld [vmem:[#allocation5 + $0xb78] sm:$0xff]
    %v520 = vld [vmem:[#allocation5 + $0xb80] sm:$0xff]
    %v521 = vld [vmem:[#allocation5 + $0xb88] sm:$0xff]
    %v522 = vld [vmem:[#allocation5 + $0xb90] sm:$0xff]
    %v523 = vld [vmem:[#allocation5 + $0xb98] sm:$0xff]
    %v524 = vld [vmem:[#allocation5 + $0xba0] sm:$0xff]
    %v525 = vld [vmem:[#allocation5 + $0xba8] sm:$0xff]
    %v526 = vld [vmem:[#allocation5 + $0xbb0] sm:$0xff]
    %v527 = vld [vmem:[#allocation5 + $0xbb8] sm:$0xff]
    %v528 = vld [vmem:[#allocation5 + $0xbc0] sm:$0xff]
    %v529 = vld [vmem:[#allocation5 + $0xbc8] sm:$0xff]
    %v530 = vld [vmem:[#allocation5 + $0xbd0] sm:$0xff]
    %v531 = vld [vmem:[#allocation5 + $0xbd8] sm:$0xff]
    %v532 = vld [vmem:[#allocation5 + $0xbe0] sm:$0xff]
    %v533 = vld [vmem:[#allocation5 + $0xbe8] sm:$0xff]
    %v534 = vld [vmem:[#allocation5 + $0xbf0] sm:$0xff]
    %v535 = vld [vmem:[#allocation5 + $0xbf8] sm:$0xff]
    %v536 = vld [vmem:[#allocation5 + $0xc00] sm:$0xff]
    %v537 = vld [vmem:[#allocation5 + $0xc08] sm:$0xff]
    %v538 = vld [vmem:[#allocation5 + $0xc10] sm:$0xff]
    %v539 = vld [vmem:[#allocation5 + $0xc18] sm:$0xff]
    %v540 = vld [vmem:[#allocation5 + $0xc20] sm:$0xff]
    %v541 = vld [vmem:[#allocation5 + $0xc28] sm:$0xff]
    %v542 = vld [vmem:[#allocation5 + $0xc30] sm:$0xff]
    %v543 = vld [vmem:[#allocation5 + $0xc38] sm:$0xff]
    %v544 = vld [vmem:[#allocation7] sm:$0xf]
    %v546 = vlaneseq
    %v547 = vshrl.u32 %v546, 7
    %v548 = vsub.s32 0, %v547
    %v549 = vrot.slane %v544, %v548
    %v550 = vlaneseq
    %v551 = vshrl.u32 %v550, 7
    %v552 = vsub.s32 1, %v551
    %v553 = vrot.slane %v544, %v552
    %v554 = vlaneseq
    %v555 = vshrl.u32 %v554, 7
    %v556 = vsub.s32 2, %v555
    %v557 = vrot.slane %v544, %v556
    %v558 = vlaneseq
    %v559 = vshrl.u32 %v558, 7
    %v560 = vsub.s32 3, %v559
    %v561 = vrot.slane %v544, %v560
    %vm566 = vcmask 130048
    %v568 = vsel %vm566, %v151, 0
    %570 = vmatprep.subr.mxu0 %v213
    %571 = vmatpush1.msra.mxu0 %v212
    %572 = vmatprep.subr.mxu0 %v209
    %573 = vmatpush1.msra.mxu0 %v208
    %574 = vmatprep.subr.mxu0 %v205
    %575 = vmatpush1.msra.mxu0 %v204
    %576 = vmatprep.subr.mxu0 %v201
    %577 = vmatpush1.msra.mxu0 %v200
    %578 = vmatprep.subr.mxu0 %v197
    %579 = vmatpush1.msra.mxu0 %v196
    %580 = vmatprep.subr.mxu0 %v193
    %581 = vmatpush1.msra.mxu0 %v192
    %582 = vmatprep.subr.mxu0 %v189
    %583 = vmatpush1.msra.mxu0 %v188
    %584 = vmatprep.subr.mxu0 %v185
    %585 = vmatpush1.msra.mxu0 %v184
    %586 = vmatprep.subr.mxu0 %v181
    %587 = vmatpush1.msra.mxu0 %v180
    %588 = vmatprep.subr.mxu0 %v177
    %589 = vmatpush1.msra.mxu0 %v176
    %590 = vmatprep.subr.mxu0 %v173
    %591 = vmatpush1.msra.mxu0 %v172
    %592 = vmatprep.subr.mxu0 %v169
    %593 = vmatpush1.msra.mxu0 %v168
    %594 = vmatprep.subr.mxu0 %v165
    %595 = vmatpush1.msra.mxu0 %v164
    %596 = vmatprep.subr.mxu0 %v161
    %597 = vmatpush1.msra.mxu0 %v160
    %598 = vmatprep.subr.mxu0 %v157
    %599 = vmatpush1.msra.mxu0 %v156
    %600 = vmatprep.subr.mxu0 %v153
    %601 = vmatpush1.msra.mxu0 %v152
    %602 = vmatprep.subr.mxu0 %v277
    %603 = vmatpush2.msra.mxu0 %v276
    %604 = vmatprep.subr.mxu0 %v273
    %605 = vmatpush2.msra.mxu0 %v272
    %606 = vmatprep.subr.mxu0 %v269
    %607 = vmatpush2.msra.mxu0 %v268
    %608 = vmatprep.subr.mxu0 %v265
    %609 = vmatpush2.msra.mxu0 %v264
    %610 = vmatprep.subr.mxu0 %v261
    %611 = vmatpush2.msra.mxu0 %v260
    %612 = vmatprep.subr.mxu0 %v257
    %613 = vmatpush2.msra.mxu0 %v256
    %614 = vmatprep.subr.mxu0 %v253
    %615 = vmatpush2.msra.mxu0 %v252
    %616 = vmatprep.subr.mxu0 %v249
    %617 = vmatpush2.msra.mxu0 %v248
    %618 = vmatprep.subr.mxu0 %v245
    %619 = vmatpush2.msra.mxu0 %v244
    %620 = vmatprep.subr.mxu0 %v241
    %621 = vmatpush2.msra.mxu0 %v240
    %622 = vmatprep.subr.mxu0 %v237
    %623 = vmatpush2.msra.mxu0 %v236
    %624 = vmatprep.subr.mxu0 %v233
    %625 = vmatpush2.msra.mxu0 %v232
    %626 = vmatprep.subr.mxu0 %v229
    %627 = vmatpush2.msra.mxu0 %v228
    %628 = vmatprep.subr.mxu0 %v225
    %629 = vmatpush2.msra.mxu0 %v224
    %630 = vmatprep.subr.mxu0 %v221
    %631 = vmatpush2.msra.mxu0 %v220
    %632 = vmatprep.subr.mxu0 %v217
    %633 = vmatpush2.msra.mxu0 %v216
    %634 = vmatprep.mubr.f32.mxu0 %v146
    %635 = vmatmul.mubr.f32.gmra.mxu0 %v145
    %v636 = vpop.f32.mrf.mxu0
    %v637 = vadd.f32 %v549, %v636
    %v638 = vpop.f32.mrf.mxu0
    %v639 = vadd.f32 %v553, %v638
    %640 = vdwg.mxu0
    %641 = vmatprep.subr.mxu0 %v341
    %642 = vmatpush1.msra.mxu0 %v340
    %643 = vmatprep.subr.mxu0 %v337
    %644 = vmatpush1.msra.mxu0 %v336
    %645 = vmatprep.subr.mxu0 %v333
    %646 = vmatpush1.msra.mxu0 %v332
    %647 = vmatprep.subr.mxu0 %v329
    %648 = vmatpush1.msra.mxu0 %v328
    %649 = vmatprep.subr.mxu0 %v325
    %650 = vmatpush1.msra.mxu0 %v324
    %651 = vmatprep.subr.mxu0 %v321
    %652 = vmatpush1.msra.mxu0 %v320
    %653 = vmatprep.subr.mxu0 %v317
    %654 = vmatpush1.msra.mxu0 %v316
    %655 = vmatprep.subr.mxu0 %v313
    %656 = vmatpush1.msra.mxu0 %v312
    %657 = vmatprep.subr.mxu0 %v309
    %658 = vmatpush1.msra.mxu0 %v308
    %659 = vmatprep.subr.mxu0 %v305
    %660 = vmatpush1.msra.mxu0 %v304
    %661 = vmatprep.subr.mxu0 %v301
    %662 = vmatpush1.msra.mxu0 %v300
    %663 = vmatprep.subr.mxu0 %v297
    %664 = vmatpush1.msra.mxu0 %v296
    %665 = vmatprep.subr.mxu0 %v293
    %666 = vmatpush1.msra.mxu0 %v292
    %667 = vmatprep.subr.mxu0 %v289
    %668 = vmatpush1.msra.mxu0 %v288
    %669 = vmatprep.subr.mxu0 %v285
    %670 = vmatpush1.msra.mxu0 %v284
    %671 = vmatprep.subr.mxu0 %v281
    %672 = vmatpush1.msra.mxu0 %v280
    %673 = vmatprep.subr.mxu0 %v405
    %674 = vmatpush2.msra.mxu0 %v404
    %675 = vmatprep.subr.mxu0 %v401
    %676 = vmatpush2.msra.mxu0 %v400
    %677 = vmatprep.subr.mxu0 %v397
    %678 = vmatpush2.msra.mxu0 %v396
    %679 = vmatprep.subr.mxu0 %v393
    %680 = vmatpush2.msra.mxu0 %v392
    %681 = vmatprep.subr.mxu0 %v389
    %682 = vmatpush2.msra.mxu0 %v388
    %683 = vmatprep.subr.mxu0 %v385
    %684 = vmatpush2.msra.mxu0 %v384
    %685 = vmatprep.subr.mxu0 %v381
    %686 = vmatpush2.msra.mxu0 %v380
    %687 = vmatprep.subr.mxu0 %v377
    %688 = vmatpush2.msra.mxu0 %v376
    %689 = vmatprep.subr.mxu0 %v373
    %690 = vmatpush2.msra.mxu0 %v372
    %691 = vmatprep.subr.mxu0 %v369
    %692 = vmatpush2.msra.mxu0 %v368
    %693 = vmatprep.subr.mxu0 %v365
    %694 = vmatpush2.msra.mxu0 %v364
    %695 = vmatprep.subr.mxu0 %v361
    %696 = vmatpush2.msra.mxu0 %v360
    %697 = vmatprep.subr.mxu0 %v357
    %698 = vmatpush2.msra.mxu0 %v356
    %699 = vmatprep.subr.mxu0 %v353
    %700 = vmatpush2.msra.mxu0 %v352
    %701 = vmatprep.subr.mxu0 %v349
    %702 = vmatpush2.msra.mxu0 %v348
    %703 = vmatprep.subr.mxu0 %v345
    %704 = vmatpush2.msra.mxu0 %v344
    %705 = vmatprep.mubr.f32.mxu0 %v148
    %706 = vmatmul.mubr.f32.gmra.mxu0 %v147
    %v707 = vpop.f32.mrf.mxu0
    %v708 = vadd.f32 %v637, %v707
    %v709 = vpop.f32.mrf.mxu0
    %v710 = vadd.f32 %v639, %v709
    %711 = vdwg.mxu0
    %712 = vmatprep.subr.mxu0 %v469
    %713 = vmatpush1.msra.mxu0 %v468
    %714 = vmatprep.subr.mxu0 %v465
    %715 = vmatpush1.msra.mxu0 %v464
    %716 = vmatprep.subr.mxu0 %v461
    %717 = vmatpush1.msra.mxu0 %v460
    %718 = vmatprep.subr.mxu0 %v457
    %719 = vmatpush1.msra.mxu0 %v456
    %720 = vmatprep.subr.mxu0 %v453
    %721 = vmatpush1.msra.mxu0 %v452
    %722 = vmatprep.subr.mxu0 %v449
    %723 = vmatpush1.msra.mxu0 %v448
    %724 = vmatprep.subr.mxu0 %v445
    %725 = vmatpush1.msra.mxu0 %v444
    %726 = vmatprep.subr.mxu0 %v441
    %727 = vmatpush1.msra.mxu0 %v440
    %728 = vmatprep.subr.mxu0 %v437
    %729 = vmatpush1.msra.mxu0 %v436
    %730 = vmatprep.subr.mxu0 %v433
    %731 = vmatpush1.msra.mxu0 %v432
    %732 = vmatprep.subr.mxu0 %v429
    %733 = vmatpush1.msra.mxu0 %v428
    %734 = vmatprep.subr.mxu0 %v425
    %735 = vmatpush1.msra.mxu0 %v424
    %736 = vmatprep.subr.mxu0 %v421
    %737 = vmatpush1.msra.mxu0 %v420
    %738 = vmatprep.subr.mxu0 %v417
    %739 = vmatpush1.msra.mxu0 %v416
    %740 = vmatprep.subr.mxu0 %v413
    %741 = vmatpush1.msra.mxu0 %v412
    %742 = vmatprep.subr.mxu0 %v409
    %743 = vmatpush1.msra.mxu0 %v408
    %744 = vmatprep.subr.mxu0 %v533
    %745 = vmatpush2.msra.mxu0 %v532
    %746 = vmatprep.subr.mxu0 %v529
    %747 = vmatpush2.msra.mxu0 %v528
    %748 = vmatprep.subr.mxu0 %v525
    %749 = vmatpush2.msra.mxu0 %v524
    %750 = vmatprep.subr.mxu0 %v521
    %751 = vmatpush2.msra.mxu0 %v520
    %752 = vmatprep.subr.mxu0 %v517
    %753 = vmatpush2.msra.mxu0 %v516
    %754 = vmatprep.subr.mxu0 %v513
    %755 = vmatpush2.msra.mxu0 %v512
    %756 = vmatprep.subr.mxu0 %v509
    %757 = vmatpush2.msra.mxu0 %v508
    %758 = vmatprep.subr.mxu0 %v505
    %759 = vmatpush2.msra.mxu0 %v504
    %760 = vmatprep.subr.mxu0 %v501
    %761 = vmatpush2.msra.mxu0 %v500
    %762 = vmatprep.subr.mxu0 %v497
    %763 = vmatpush2.msra.mxu0 %v496
    %764 = vmatprep.subr.mxu0 %v493
    %765 = vmatpush2.msra.mxu0 %v492
    %766 = vmatprep.subr.mxu0 %v489
    %767 = vmatpush2.msra.mxu0 %v488
    %768 = vmatprep.subr.mxu0 %v485
    %769 = vmatpush2.msra.mxu0 %v484
    %770 = vmatprep.subr.mxu0 %v481
    %771 = vmatpush2.msra.mxu0 %v480
    %772 = vmatprep.subr.mxu0 %v477
    %773 = vmatpush2.msra.mxu0 %v476
    %774 = vmatprep.subr.mxu0 %v473
    %775 = vmatpush2.msra.mxu0 %v472
    %776 = vmatprep.mubr.f32.mxu0 %v150
    %777 = vmatmul.mubr.f32.gmra.mxu0 %v149
    %v778 = vpop.f32.mrf.mxu0
    %v779 = vadd.f32 %v708, %v778
    %v780 = vpop.f32.mrf.mxu0
    %v781 = vadd.f32 %v710, %v780
    %782 = vdwg.mxu0
    %783 = vmatprep.subr.mxu0 0.0
    %784 = vmatpush1.msra.mxu0 0.0
    %785 = vmatprep.subr.mxu0 0.0
    %786 = vmatpush1.msra.mxu0 0.0
    %787 = vmatprep.subr.mxu0 0.0
    %788 = vmatpush1.msra.mxu0 0.0
    %789 = vmatprep.subr.mxu0 0.0
    %790 = vmatpush1.msra.mxu0 0.0
    %791 = vmatprep.subr.mxu0 0.0
    %792 = vmatpush1.msra.mxu0 0.0
    %793 = vmatprep.subr.mxu0 0.0
    %794 = vmatpush1.msra.mxu0 0.0
    %795 = vmatprep.subr.mxu0 0.0
    %796 = vmatpush1.msra.mxu0 0.0
    %797 = vmatprep.subr.mxu0 0.0
    %798 = vmatpush1.msra.mxu0 0.0
    %799 = vmatprep.subr.mxu0 0.0
    %800 = vmatpush1.msra.mxu0 0.0
    %801 = vmatprep.subr.mxu0 0.0
    %802 = vmatpush1.msra.mxu0 0.0
    %803 = vmatprep.subr.mxu0 0.0
    %804 = vmatpush1.msra.mxu0 0.0
    %805 = vmatprep.subr.mxu0 0.0
    %806 = vmatpush1.msra.mxu0 0.0
    %807 = vmatprep.subr.mxu0 0.0
    %808 = vmatpush1.msra.mxu0 0.0
    %809 = vmatprep.subr.mxu0 0.0
    %810 = vmatpush1.msra.mxu0 0.0
    %811 = vmatprep.subr.mxu0 %v541
    %812 = vmatpush1.msra.mxu0 %v540
    %813 = vmatprep.subr.mxu0 %v537
    %814 = vmatpush1.msra.mxu0 %v536
    %815 = vmatprep.subr.mxu0 0.0
    %816 = vmatpush2.msra.mxu0 0.0
    %817 = vmatprep.subr.mxu0 0.0
    %818 = vmatpush2.msra.mxu0 0.0
    %819 = vmatprep.subr.mxu0 0.0
    %820 = vmatpush2.msra.mxu0 0.0
    %821 = vmatprep.subr.mxu0 0.0
    %822 = vmatpush2.msra.mxu0 0.0
    %823 = vmatprep.subr.mxu0 0.0
    %824 = vmatpush2.msra.mxu0 0.0
    %825 = vmatprep.subr.mxu0 0.0
    %826 = vmatpush2.msra.mxu0 0.0
    %827 = vmatprep.subr.mxu0 0.0
    %828 = vmatpush2.msra.mxu0 0.0
    %829 = vmatprep.subr.mxu0 0.0
    %830 = vmatpush2.msra.mxu0 0.0
    %831 = vmatprep.subr.mxu0 0.0
    %832 = vmatpush2.msra.mxu0 0.0
    %833 = vmatprep.subr.mxu0 0.0
    %834 = vmatpush2.msra.mxu0 0.0
    %835 = vmatprep.subr.mxu0 0.0
    %836 = vmatpush2.msra.mxu0 0.0
    %837 = vmatprep.subr.mxu0 0.0
    %838 = vmatpush2.msra.mxu0 0.0
    %839 = vmatprep.subr.mxu0 0.0
    %840 = vmatpush2.msra.mxu0 0.0
    %841 = vmatprep.subr.mxu0 0.0
    %842 = vmatpush2.msra.mxu0 0.0
    %843 = vmatprep.subr.mxu0 0.0
    %844 = vmatpush2.msra.mxu0 0.0
    %845 = vmatprep.subr.mxu0 0.0
    %846 = vmatpush2.msra.mxu0 0.0
    %847 = vmatprep.mubr.f32.mxu0 0.0
    %848 = vmatmul.mubr.f32.gmra.mxu0 %v568
    %v849 = vpop.f32.mrf.mxu0
    %v850 = vadd.f32 %v779, %v849
    %v851 = vpop.f32.mrf.mxu0
    %v852 = vadd.f32 %v781, %v851
    %853 = vdwg.mxu0
    %854 = vmatprep.subr.mxu0 %v215
    %855 = vmatpush1.msra.mxu0 %v214
    %856 = vmatprep.subr.mxu0 %v211
    %857 = vmatpush1.msra.mxu0 %v210
    %858 = vmatprep.subr.mxu0 %v207
    %859 = vmatpush1.msra.mxu0 %v206
    %860 = vmatprep.subr.mxu0 %v203
    %861 = vmatpush1.msra.mxu0 %v202
    %862 = vmatprep.subr.mxu0 %v199
    %863 = vmatpush1.msra.mxu0 %v198
    %864 = vmatprep.subr.mxu0 %v195
    %865 = vmatpush1.msra.mxu0 %v194
    %866 = vmatprep.subr.mxu0 %v191
    %867 = vmatpush1.msra.mxu0 %v190
    %868 = vmatprep.subr.mxu0 %v187
    %869 = vmatpush1.msra.mxu0 %v186
    %870 = vmatprep.subr.mxu0 %v183
    %871 = vmatpush1.msra.mxu0 %v182
    %872 = vmatprep.subr.mxu0 %v179
    %873 = vmatpush1.msra.mxu0 %v178
    %874 = vmatprep.subr.mxu0 %v175
    %875 = vmatpush1.msra.mxu0 %v174
    %876 = vmatprep.subr.mxu0 %v171
    %877 = vmatpush1.msra.mxu0 %v170
    %878 = vmatprep.subr.mxu0 %v167
    %879 = vmatpush1.msra.mxu0 %v166
    %880 = vmatprep.subr.mxu0 %v163
    %881 = vmatpush1.msra.mxu0 %v162
    %882 = vmatprep.subr.mxu0 %v159
    %883 = vmatpush1.msra.mxu0 %v158
    %884 = vmatprep.subr.mxu0 %v155
    %885 = vmatpush1.msra.mxu0 %v154
    %886 = vmatprep.subr.mxu0 %v279
    %887 = vmatpush2.msra.mxu0 %v278
    %888 = vmatprep.subr.mxu0 %v275
    %889 = vmatpush2.msra.mxu0 %v274
    %890 = vmatprep.subr.mxu0 %v271
    %891 = vmatpush2.msra.mxu0 %v270
    %892 = vmatprep.subr.mxu0 %v267
    %893 = vmatpush2.msra.mxu0 %v266
    %894 = vmatprep.subr.mxu0 %v263
    %895 = vmatpush2.msra.mxu0 %v262
    %896 = vmatprep.subr.mxu0 %v259
    %897 = vmatpush2.msra.mxu0 %v258
    %898 = vmatprep.subr.mxu0 %v255
    %899 = vmatpush2.msra.mxu0 %v254
    %900 = vmatprep.subr.mxu0 %v251
    %901 = vmatpush2.msra.mxu0 %v250
    %902 = vmatprep.subr.mxu0 %v247
    %903 = vmatpush2.msra.mxu0 %v246
    %904 = vmatprep.subr.mxu0 %v243
    %905 = vmatpush2.msra.mxu0 %v242
    %906 = vmatprep.subr.mxu0 %v239
    %907 = vmatpush2.msra.mxu0 %v238
    %908 = vmatprep.subr.mxu0 %v235
    %909 = vmatpush2.msra.mxu0 %v234
    %910 = vmatprep.subr.mxu0 %v231
    %911 = vmatpush2.msra.mxu0 %v230
    %912 = vmatprep.subr.mxu0 %v227
    %913 = vmatpush2.msra.mxu0 %v226
    %914 = vmatprep.subr.mxu0 %v223
    %915 = vmatpush2.msra.mxu0 %v222
    %916 = vmatprep.subr.mxu0 %v219
    %917 = vmatpush2.msra.mxu0 %v218
    %918 = vmatprep.mubr.f32.mxu0 %v146
    %919 = vmatmul.mubr.f32.gmra.mxu0 %v145
    %v920 = vpop.f32.mrf.mxu0
    %v921 = vadd.f32 %v557, %v920
    %v922 = vpop.f32.mrf.mxu0
    %v923 = vadd.f32 %v561, %v922
    %924 = vdwg.mxu0
    %925 = vmatprep.subr.mxu0 %v343
    %926 = vmatpush1.msra.mxu0 %v342
    %927 = vmatprep.subr.mxu0 %v339
    %928 = vmatpush1.msra.mxu0 %v338
    %929 = vmatprep.subr.mxu0 %v335
    %930 = vmatpush1.msra.mxu0 %v334
    %931 = vmatprep.subr.mxu0 %v331
    %932 = vmatpush1.msra.mxu0 %v330
    %933 = vmatprep.subr.mxu0 %v327
    %934 = vmatpush1.msra.mxu0 %v326
    %935 = vmatprep.subr.mxu0 %v323
    %936 = vmatpush1.msra.mxu0 %v322
    %937 = vmatprep.subr.mxu0 %v319
    %938 = vmatpush1.msra.mxu0 %v318
    %939 = vmatprep.subr.mxu0 %v315
    %940 = vmatpush1.msra.mxu0 %v314
    %941 = vmatprep.subr.mxu0 %v311
    %942 = vmatpush1.msra.mxu0 %v310
    %943 = vmatprep.subr.mxu0 %v307
    %944 = vmatpush1.msra.mxu0 %v306
    %945 = vmatprep.subr.mxu0 %v303
    %946 = vmatpush1.msra.mxu0 %v302
    %947 = vmatprep.subr.mxu0 %v299
    %948 = vmatpush1.msra.mxu0 %v298
    %949 = vmatprep.subr.mxu0 %v295
    %950 = vmatpush1.msra.mxu0 %v294
    %951 = vmatprep.subr.mxu0 %v291
    %952 = vmatpush1.msra.mxu0 %v290
    %953 = vmatprep.subr.mxu0 %v287
    %954 = vmatpush1.msra.mxu0 %v286
    %955 = vmatprep.subr.mxu0 %v283
    %956 = vmatpush1.msra.mxu0 %v282
    %957 = vmatprep.subr.mxu0 %v407
    %958 = vmatpush2.msra.mxu0 %v406
    %959 = vmatprep.subr.mxu0 %v403
    %960 = vmatpush2.msra.mxu0 %v402
    %961 = vmatprep.subr.mxu0 %v399
    %962 = vmatpush2.msra.mxu0 %v398
    %963 = vmatprep.subr.mxu0 %v395
    %964 = vmatpush2.msra.mxu0 %v394
    %965 = vmatprep.subr.mxu0 %v391
    %966 = vmatpush2.msra.mxu0 %v390
    %967 = vmatprep.subr.mxu0 %v387
    %968 = vmatpush2.msra.mxu0 %v386
    %969 = vmatprep.subr.mxu0 %v383
    %970 = vmatpush2.msra.mxu0 %v382
    %971 = vmatprep.subr.mxu0 %v379
    %972 = vmatpush2.msra.mxu0 %v378
    %973 = vmatprep.subr.mxu0 %v375
    %974 = vmatpush2.msra.mxu0 %v374
    %975 = vmatprep.subr.mxu0 %v371
    %976 = vmatpush2.msra.mxu0 %v370
    %977 = vmatprep.subr.mxu0 %v367
    %978 = vmatpush2.msra.mxu0 %v366
    %979 = vmatprep.subr.mxu0 %v363
    %980 = vmatpush2.msra.mxu0 %v362
    %981 = vmatprep.subr.mxu0 %v359
    %982 = vmatpush2.msra.mxu0 %v358
    %983 = vmatprep.subr.mxu0 %v355
    %984 = vmatpush2.msra.mxu0 %v354
    %985 = vmatprep.subr.mxu0 %v351
    %986 = vmatpush2.msra.mxu0 %v350
    %987 = vmatprep.subr.mxu0 %v347
    %988 = vmatpush2.msra.mxu0 %v346
    %989 = vmatprep.mubr.f32.mxu0 %v148
    %990 = vmatmul.mubr.f32.gmra.mxu0 %v147
    %v991 = vpop.f32.mrf.mxu0
    %v992 = vadd.f32 %v921, %v991
    %v993 = vpop.f32.mrf.mxu0
    %v994 = vadd.f32 %v923, %v993
    %995 = vdwg.mxu0
    %996 = vmatprep.subr.mxu0 %v471
    %997 = vmatpush1.msra.mxu0 %v470
    %998 = vmatprep.subr.mxu0 %v467
    %999 = vmatpush1.msra.mxu0 %v466
    %1000 = vmatprep.subr.mxu0 %v463
    %1001 = vmatpush1.msra.mxu0 %v462
    %1002 = vmatprep.subr.mxu0 %v459
    %1003 = vmatpush1.msra.mxu0 %v458
    %1004 = vmatprep.subr.mxu0 %v455
    %1005 = vmatpush1.msra.mxu0 %v454
    %1006 = vmatprep.subr.mxu0 %v451
    %1007 = vmatpush1.msra.mxu0 %v450
    %1008 = vmatprep.subr.mxu0 %v447
    %1009 = vmatpush1.msra.mxu0 %v446
    %1010 = vmatprep.subr.mxu0 %v443
    %1011 = vmatpush1.msra.mxu0 %v442
    %1012 = vmatprep.subr.mxu0 %v439
    %1013 = vmatpush1.msra.mxu0 %v438
    %1014 = vmatprep.subr.mxu0 %v435
    %1015 = vmatpush1.msra.mxu0 %v434
    %1016 = vmatprep.subr.mxu0 %v431
    %1017 = vmatpush1.msra.mxu0 %v430
    %1018 = vmatprep.subr.mxu0 %v427
    %1019 = vmatpush1.msra.mxu0 %v426
    %1020 = vmatprep.subr.mxu0 %v423
    %1021 = vmatpush1.msra.mxu0 %v422
    %1022 = vmatprep.subr.mxu0 %v419
    %1023 = vmatpush1.msra.mxu0 %v418
    %1024 = vmatprep.subr.mxu0 %v415
    %1025 = vmatpush1.msra.mxu0 %v414
    %1026 = vmatprep.subr.mxu0 %v411
    %1027 = vmatpush1.msra.mxu0 %v410
    %1028 = vmatprep.subr.mxu0 %v535
    %1029 = vmatpush2.msra.mxu0 %v534
    %1030 = vmatprep.subr.mxu0 %v531
    %1031 = vmatpush2.msra.mxu0 %v530
    %1032 = vmatprep.subr.mxu0 %v527
    %1033 = vmatpush2.msra.mxu0 %v526
    %1034 = vmatprep.subr.mxu0 %v523
    %1035 = vmatpush2.msra.mxu0 %v522
    %1036 = vmatprep.subr.mxu0 %v519
    %1037 = vmatpush2.msra.mxu0 %v518
    %1038 = vmatprep.subr.mxu0 %v515
    %1039 = vmatpush2.msra.mxu0 %v514
    %1040 = vmatprep.subr.mxu0 %v511
    %1041 = vmatpush2.msra.mxu0 %v510
    %1042 = vmatprep.subr.mxu0 %v507
    %1043 = vmatpush2.msra.mxu0 %v506
    %1044 = vmatprep.subr.mxu0 %v503
    %1045 = vmatpush2.msra.mxu0 %v502
    %1046 = vmatprep.subr.mxu0 %v499
    %1047 = vmatpush2.msra.mxu0 %v498
    %1048 = vmatprep.subr.mxu0 %v495
    %1049 = vmatpush2.msra.mxu0 %v494
    %1050 = vmatprep.subr.mxu0 %v491
    %1051 = vmatpush2.msra.mxu0 %v490
    %1052 = vmatprep.subr.mxu0 %v487
    %1053 = vmatpush2.msra.mxu0 %v486
    %1054 = vmatprep.subr.mxu0 %v483
    %1055 = vmatpush2.msra.mxu0 %v482
    %1056 = vmatprep.subr.mxu0 %v479
    %1057 = vmatpush2.msra.mxu0 %v478
    %1058 = vmatprep.subr.mxu0 %v475
    %1059 = vmatpush2.msra.mxu0 %v474
    %1060 = vmatprep.mubr.f32.mxu0 %v150
    %1061 = vmatmul.mubr.f32.gmra.mxu0 %v149
    %v1062 = vpop.f32.mrf.mxu0
    %v1063 = vadd.f32 %v992, %v1062
    %v1064 = vpop.f32.mrf.mxu0
    %v1065 = vadd.f32 %v994, %v1064
    %1066 = vdwg.mxu0
    %1067 = vmatprep.subr.mxu0 0.0
    %1068 = vmatpush1.msra.mxu0 0.0
    %1069 = vmatprep.subr.mxu0 0.0
    %1070 = vmatpush1.msra.mxu0 0.0
    %1071 = vmatprep.subr.mxu0 0.0
    %1072 = vmatpush1.msra.mxu0 0.0
    %1073 = vmatprep.subr.mxu0 0.0
    %1074 = vmatpush1.msra.mxu0 0.0
    %1075 = vmatprep.subr.mxu0 0.0
    %1076 = vmatpush1.msra.mxu0 0.0
    %1077 = vmatprep.subr.mxu0 0.0
    %1078 = vmatpush1.msra.mxu0 0.0
    %1079 = vmatprep.subr.mxu0 0.0
    %1080 = vmatpush1.msra.mxu0 0.0
    %1081 = vmatprep.subr.mxu0 0.0
    %1082 = vmatpush1.msra.mxu0 0.0
    %1083 = vmatprep.subr.mxu0 0.0
    %1084 = vmatpush1.msra.mxu0 0.0
    %1085 = vmatprep.subr.mxu0 0.0
    %1086 = vmatpush1.msra.mxu0 0.0
    %1087 = vmatprep.subr.mxu0 0.0
    %1088 = vmatpush1.msra.mxu0 0.0
    %1089 = vmatprep.subr.mxu0 0.0
    %1090 = vmatpush1.msra.mxu0 0.0
    %1091 = vmatprep.subr.mxu0 0.0
    %1092 = vmatpush1.msra.mxu0 0.0
    %1093 = vmatprep.subr.mxu0 0.0
    %1094 = vmatpush1.msra.mxu0 0.0
    %1095 = vmatprep.subr.mxu0 %v543
    %1096 = vmatpush1.msra.mxu0 %v542
    %1097 = vmatprep.subr.mxu0 %v539
    %1098 = vmatpush1.msra.mxu0 %v538
    %1099 = vmatprep.subr.mxu0 0.0
    %1100 = vmatpush2.msra.mxu0 0.0
    %1101 = vmatprep.subr.mxu0 0.0
    %1102 = vmatpush2.msra.mxu0 0.0
    %1103 = vmatprep.subr.mxu0 0.0
    %1104 = vmatpush2.msra.mxu0 0.0
    %1105 = vmatprep.subr.mxu0 0.0
    %1106 = vmatpush2.msra.mxu0 0.0
    %1107 = vmatprep.subr.mxu0 0.0
    %1108 = vmatpush2.msra.mxu0 0.0
    %1109 = vmatprep.subr.mxu0 0.0
    %1110 = vmatpush2.msra.mxu0 0.0
    %1111 = vmatprep.subr.mxu0 0.0
    %1112 = vmatpush2.msra.mxu0 0.0
    %1113 = vmatprep.subr.mxu0 0.0
    %1114 = vmatpush2.msra.mxu0 0.0
    %1115 = vmatprep.subr.mxu0 0.0
    %1116 = vmatpush2.msra.mxu0 0.0
    %1117 = vmatprep.subr.mxu0 0.0
    %1118 = vmatpush2.msra.mxu0 0.0
    %1119 = vmatprep.subr.mxu0 0.0
    %1120 = vmatpush2.msra.mxu0 0.0
    %1121 = vmatprep.subr.mxu0 0.0
    %1122 = vmatpush2.msra.mxu0 0.0
    %1123 = vmatprep.subr.mxu0 0.0
    %1124 = vmatpush2.msra.mxu0 0.0
    %1125 = vmatprep.subr.mxu0 0.0
    %1126 = vmatpush2.msra.mxu0 0.0
    %1127 = vmatprep.subr.mxu0 0.0
    %1128 = vmatpush2.msra.mxu0 0.0
    %1129 = vmatprep.subr.mxu0 0.0
    %1130 = vmatpush2.msra.mxu0 0.0
    %1131 = vmatprep.mubr.f32.mxu0 0.0
    %1132 = vmatmul.mubr.f32.gmra.mxu0 %v568
    %v1133 = vpop.f32.mrf.mxu0
    %v1134 = vadd.f32 %v1063, %v1133
    %v1135 = vpop.f32.mrf.mxu0
    %v1136 = vadd.f32 %v1065, %v1135
    %1137 = vdwg.mxu0
    %v1138 = vmax.f32 %v850, 0.0
    %v1139 = vmax.f32 %v852, 0.0
    %v1140 = vmax.f32 %v1134, 0.0
    %v1141 = vmax.f32 %v1136, 0.0
    %v1142 = vld [vmem:[#allocation8] sm:$0xff]
    %v1143 = vld [vmem:[#allocation8 + $0x8] sm:$0xff]
    %v1144 = vld [vmem:[#allocation8 + $0x10] sm:$0xff]
    %v1145 = vld [vmem:[#allocation8 + $0x18] sm:$0xff]
    %v1146 = vld [vmem:[#allocation8 + $0x20] sm:$0xff]
    %v1147 = vld [vmem:[#allocation8 + $0x28] sm:$0xff]
    %v1148 = vld [vmem:[#allocation8 + $0x30] sm:$0xff]
    %v1149 = vld [vmem:[#allocation8 + $0x38] sm:$0xff]
    %v1150 = vld [vmem:[#allocation8 + $0x40] sm:$0xff]
    %v1151 = vld [vmem:[#allocation8 + $0x48] sm:$0xff]
    %v1152 = vld [vmem:[#allocation8 + $0x50] sm:$0xff]
    %v1153 = vld [vmem:[#allocation8 + $0x58] sm:$0xff]
    %v1154 = vld [vmem:[#allocation8 + $0x60] sm:$0xff]
    %v1155 = vld [vmem:[#allocation8 + $0x68] sm:$0xff]
    %v1156 = vld [vmem:[#allocation8 + $0x70] sm:$0xff]
    %v1157 = vld [vmem:[#allocation8 + $0x78] sm:$0xff]
    %v1158 = vld [vmem:[#allocation8 + $0x80] sm:$0xff]
    %v1159 = vld [vmem:[#allocation8 + $0x88] sm:$0xff]
    %v1160 = vld [vmem:[#allocation8 + $0x90] sm:$0xff]
    %v1161 = vld [vmem:[#allocation8 + $0x98] sm:$0xff]
    %v1162 = vld [vmem:[#allocation8 + $0xa0] sm:$0xff]
    %v1163 = vld [vmem:[#allocation8 + $0xa8] sm:$0xff]
    %v1164 = vld [vmem:[#allocation8 + $0xb0] sm:$0xff]
    %v1165 = vld [vmem:[#allocation8 + $0xb8] sm:$0xff]
    %v1166 = vld [vmem:[#allocation8 + $0xc0] sm:$0xff]
    %v1167 = vld [vmem:[#allocation8 + $0xc8] sm:$0xff]
    %v1168 = vld [vmem:[#allocation8 + $0xd0] sm:$0xff]
    %v1169 = vld [vmem:[#allocation8 + $0xd8] sm:$0xff]
    %v1170 = vld [vmem:[#allocation8 + $0xe0] sm:$0xff]
    %v1171 = vld [vmem:[#allocation8 + $0xe8] sm:$0xff]
    %v1172 = vld [vmem:[#allocation8 + $0xf0] sm:$0xff]
    %v1173 = vld [vmem:[#allocation8 + $0xf8] sm:$0xff]
    %v1174 = vld [vmem:[#allocation8 + $0x100] sm:$0xff]
    %v1175 = vld [vmem:[#allocation8 + $0x108] sm:$0xff]
    %v1176 = vld [vmem:[#allocation8 + $0x110] sm:$0xff]
    %v1177 = vld [vmem:[#allocation8 + $0x118] sm:$0xff]
    %v1178 = vld [vmem:[#allocation8 + $0x120] sm:$0xff]
    %v1179 = vld [vmem:[#allocation8 + $0x128] sm:$0xff]
    %v1180 = vld [vmem:[#allocation8 + $0x130] sm:$0xff]
    %v1181 = vld [vmem:[#allocation8 + $0x138] sm:$0xff]
    %v1182 = vld [vmem:[#allocation8 + $0x140] sm:$0xff]
    %v1183 = vld [vmem:[#allocation8 + $0x148] sm:$0xff]
    %v1184 = vld [vmem:[#allocation8 + $0x150] sm:$0xff]
    %v1185 = vld [vmem:[#allocation8 + $0x158] sm:$0xff]
    %v1186 = vld [vmem:[#allocation8 + $0x160] sm:$0xff]
    %v1187 = vld [vmem:[#allocation8 + $0x168] sm:$0xff]
    %v1188 = vld [vmem:[#allocation8 + $0x170] sm:$0xff]
    %v1189 = vld [vmem:[#allocation8 + $0x178] sm:$0xff]
    %v1190 = vld [vmem:[#allocation8 + $0x180] sm:$0xff]
    %v1191 = vld [vmem:[#allocation8 + $0x188] sm:$0xff]
    %v1192 = vld [vmem:[#allocation8 + $0x190] sm:$0xff]
    %v1193 = vld [vmem:[#allocation8 + $0x198] sm:$0xff]
    %v1194 = vld [vmem:[#allocation8 + $0x1a0] sm:$0xff]
    %v1195 = vld [vmem:[#allocation8 + $0x1a8] sm:$0xff]
    %v1196 = vld [vmem:[#allocation8 + $0x1b0] sm:$0xff]
    %v1197 = vld [vmem:[#allocation8 + $0x1b8] sm:$0xff]
    %v1198 = vld [vmem:[#allocation8 + $0x1c0] sm:$0xff]
    %v1199 = vld [vmem:[#allocation8 + $0x1c8] sm:$0xff]
    %v1200 = vld [vmem:[#allocation8 + $0x1d0] sm:$0xff]
    %v1201 = vld [vmem:[#allocation8 + $0x1d8] sm:$0xff]
    %v1202 = vld [vmem:[#allocation8 + $0x1e0] sm:$0xff]
    %v1203 = vld [vmem:[#allocation8 + $0x1e8] sm:$0xff]
    %v1204 = vld [vmem:[#allocation8 + $0x1f0] sm:$0xff]
    %v1205 = vld [vmem:[#allocation8 + $0x1f8] sm:$0xff]
    %v1206 = vld [vmem:[#allocation10] sm:$0x1]
    %v1208 = vlaneseq
    %v1209 = vshrl.u32 %v1208, 7
    %v1210 = vsub.s32 0, %v1209
    %v1211 = vrot.slane %v1206, %v1210
    %1213 = vmatprep.subr.mxu0 0.0
    %1214 = vmatpush1.msra.mxu0 %v1157
    %1215 = vmatprep.subr.mxu0 0.0
    %1216 = vmatpush1.msra.mxu0 %v1156
    %1217 = vmatprep.subr.mxu0 0.0
    %1218 = vmatpush1.msra.mxu0 %v1155
    %1219 = vmatprep.subr.mxu0 0.0
    %1220 = vmatpush1.msra.mxu0 %v1154
    %1221 = vmatprep.subr.mxu0 0.0
    %1222 = vmatpush1.msra.mxu0 %v1153
    %1223 = vmatprep.subr.mxu0 0.0
    %1224 = vmatpush1.msra.mxu0 %v1152
    %1225 = vmatprep.subr.mxu0 0.0
    %1226 = vmatpush1.msra.mxu0 %v1151
    %1227 = vmatprep.subr.mxu0 0.0
    %1228 = vmatpush1.msra.mxu0 %v1150
    %1229 = vmatprep.subr.mxu0 0.0
    %1230 = vmatpush1.msra.mxu0 %v1149
    %1231 = vmatprep.subr.mxu0 0.0
    %1232 = vmatpush1.msra.mxu0 %v1148
    %1233 = vmatprep.subr.mxu0 0.0
    %1234 = vmatpush1.msra.mxu0 %v1147
    %1235 = vmatprep.subr.mxu0 0.0
    %1236 = vmatpush1.msra.mxu0 %v1146
    %1237 = vmatprep.subr.mxu0 0.0
    %1238 = vmatpush1.msra.mxu0 %v1145
    %1239 = vmatprep.subr.mxu0 0.0
    %1240 = vmatpush1.msra.mxu0 %v1144
    %1241 = vmatprep.subr.mxu0 0.0
    %1242 = vmatpush1.msra.mxu0 %v1143
    %1243 = vmatprep.subr.mxu0 0.0
    %1244 = vmatpush1.msra.mxu0 %v1142
    %1245 = vmatprep.subr.mxu0 0.0
    %1246 = vmatpush2.msra.mxu0 %v1173
    %1247 = vmatprep.subr.mxu0 0.0
    %1248 = vmatpush2.msra.mxu0 %v1172
    %1249 = vmatprep.subr.mxu0 0.0
    %1250 = vmatpush2.msra.mxu0 %v1171
    %1251 = vmatprep.subr.mxu0 0.0
    %1252 = vmatpush2.msra.mxu0 %v1170
    %1253 = vmatprep.subr.mxu0 0.0
    %1254 = vmatpush2.msra.mxu0 %v1169
    %1255 = vmatprep.subr.mxu0 0.0
    %1256 = vmatpush2.msra.mxu0 %v1168
    %1257 = vmatprep.subr.mxu0 0.0
    %1258 = vmatpush2.msra.mxu0 %v1167
    %1259 = vmatprep.subr.mxu0 0.0
    %1260 = vmatpush2.msra.mxu0 %v1166
    %1261 = vmatprep.subr.mxu0 0.0
    %1262 = vmatpush2.msra.mxu0 %v1165
    %1263 = vmatprep.subr.mxu0 0.0
    %1264 = vmatpush2.msra.mxu0 %v1164
    %1265 = vmatprep.subr.mxu0 0.0
    %1266 = vmatpush2.msra.mxu0 %v1163
    %1267 = vmatprep.subr.mxu0 0.0
    %1268 = vmatpush2.msra.mxu0 %v1162
    %1269 = vmatprep.subr.mxu0 0.0
    %1270 = vmatpush2.msra.mxu0 %v1161
    %1271 = vmatprep.subr.mxu0 0.0
    %1272 = vmatpush2.msra.mxu0 %v1160
    %1273 = vmatprep.subr.mxu0 0.0
    %1274 = vmatpush2.msra.mxu0 %v1159
    %1275 = vmatprep.subr.mxu0 0.0
    %1276 = vmatpush2.msra.mxu0 %v1158
    %1277 = vmatprep.mubr.f32.mxu0 %v1139
    %1278 = vmatmul.mubr.f32.gmra.mxu0 %v1138
    %v1279 = vpop.f32.mrf.mxu0
    %v1280 = vadd.f32 %v1211, %v1279
    %v1281 = vpop.f32.mrf.mxu0
    %1282 = vdwg.mxu0
    %1283 = vmatprep.subr.mxu0 0.0
    %1284 = vmatpush1.msra.mxu0 %v1189
    %1285 = vmatprep.subr.mxu0 0.0
    %1286 = vmatpush1.msra.mxu0 %v1188
    %1287 = vmatprep.subr.mxu0 0.0
    %1288 = vmatpush1.msra.mxu0 %v1187
    %1289 = vmatprep.subr.mxu0 0.0
    %1290 = vmatpush1.msra.mxu0 %v1186
    %1291 = vmatprep.subr.mxu0 0.0
    %1292 = vmatpush1.msra.mxu0 %v1185
    %1293 = vmatprep.subr.mxu0 0.0
    %1294 = vmatpush1.msra.mxu0 %v1184
    %1295 = vmatprep.subr.mxu0 0.0
    %1296 = vmatpush1.msra.mxu0 %v1183
    %1297 = vmatprep.subr.mxu0 0.0
    %1298 = vmatpush1.msra.mxu0 %v1182
    %1299 = vmatprep.subr.mxu0 0.0
    %1300 = vmatpush1.msra.mxu0 %v1181
    %1301 = vmatprep.subr.mxu0 0.0
    %1302 = vmatpush1.msra.mxu0 %v1180
    %1303 = vmatprep.subr.mxu0 0.0
    %1304 = vmatpush1.msra.mxu0 %v1179
    %1305 = vmatprep.subr.mxu0 0.0
    %1306 = vmatpush1.msra.mxu0 %v1178
    %1307 = vmatprep.subr.mxu0 0.0
    %1308 = vmatpush1.msra.mxu0 %v1177
    %1309 = vmatprep.subr.mxu0 0.0
    %1310 = vmatpush1.msra.mxu0 %v1176
    %1311 = vmatprep.subr.mxu0 0.0
    %1312 = vmatpush1.msra.mxu0 %v1175
    %1313 = vmatprep.subr.mxu0 0.0
    %1314 = vmatpush1.msra.mxu0 %v1174
    %1315 = vmatprep.subr.mxu0 0.0
    %1316 = vmatpush2.msra.mxu0 %v1205
    %1317 = vmatprep.subr.mxu0 0.0
    %1318 = vmatpush2.msra.mxu0 %v1204
    %1319 = vmatprep.subr.mxu0 0.0
    %1320 = vmatpush2.msra.mxu0 %v1203
    %1321 = vmatprep.subr.mxu0 0.0
    %1322 = vmatpush2.msra.mxu0 %v1202
    %1323 = vmatprep.subr.mxu0 0.0
    %1324 = vmatpush2.msra.mxu0 %v1201
    %1325 = vmatprep.subr.mxu0 0.0
    %1326 = vmatpush2.msra.mxu0 %v1200
    %1327 = vmatprep.subr.mxu0 0.0
    %1328 = vmatpush2.msra.mxu0 %v1199
    %1329 = vmatprep.subr.mxu0 0.0
    %1330 = vmatpush2.msra.mxu0 %v1198
    %1331 = vmatprep.subr.mxu0 0.0
    %1332 = vmatpush2.msra.mxu0 %v1197
    %1333 = vmatprep.subr.mxu0 0.0
    %1334 = vmatpush2.msra.mxu0 %v1196
    %1335 = vmatprep.subr.mxu0 0.0
    %1336 = vmatpush2.msra.mxu0 %v1195
    %1337 = vmatprep.subr.mxu0 0.0
    %1338 = vmatpush2.msra.mxu0 %v1194
    %1339 = vmatprep.subr.mxu0 0.0
    %1340 = vmatpush2.msra.mxu0 %v1193
    %1341 = vmatprep.subr.mxu0 0.0
    %1342 = vmatpush2.msra.mxu0 %v1192
    %1343 = vmatprep.subr.mxu0 0.0
    %1344 = vmatpush2.msra.mxu0 %v1191
    %1345 = vmatprep.subr.mxu0 0.0
    %1346 = vmatpush2.msra.mxu0 %v1190
    %1347 = vmatprep.mubr.f32.mxu0 %v1141
    %1348 = vmatmul.mubr.f32.gmra.mxu0 %v1140
    %v1349 = vpop.f32.mrf.mxu0
    %v1350 = vadd.f32 %v1280, %v1349
    %v1351 = vpop.f32.mrf.mxu0
    %1352 = vdwg.mxu0
    %v1353 = vmax.f32 %v1350, 0.0
    %v1354 = vld [vmem:[#allocation11] sm:$0xff]
    %v1355 = vld [vmem:[#allocation11 + $0x8] sm:$0xff]
    %v1356 = vld [vmem:[#allocation11 + $0x10] sm:$0xff]
    %v1357 = vld [vmem:[#allocation11 + $0x18] sm:$0xff]
    %v1358 = vld [vmem:[#allocation11 + $0x20] sm:$0xff]
    %v1359 = vld [vmem:[#allocation11 + $0x28] sm:$0xff]
    %v1360 = vld [vmem:[#allocation11 + $0x30] sm:$0xff]
    %v1361 = vld [vmem:[#allocation11 + $0x38] sm:$0xff]
    %v1362 = vld [vmem:[#allocation11 + $0x40] sm:$0xff]
    %v1363 = vld [vmem:[#allocation11 + $0x48] sm:$0xff]
    %v1364 = vld [vmem:[#allocation11 + $0x50] sm:$0xff]
    %v1365 = vld [vmem:[#allocation11 + $0x58] sm:$0xff]
    %v1366 = vld [vmem:[#allocation11 + $0x60] sm:$0xff]
    %v1367 = vld [vmem:[#allocation11 + $0x68] sm:$0xff]
    %v1368 = vld [vmem:[#allocation11 + $0x70] sm:$0xff]
    %v1369 = vld [vmem:[#allocation11 + $0x78] sm:$0xff]
    %v1370 = vld [vmem:[#allocation13] sm:$0x1]
    %v1372 = vlaneseq
    %v1373 = vshrl.u32 %v1372, 7
    %v1374 = vsub.s32 0, %v1373
    %v1375 = vrot.slane %v1370, %v1374
    %1377 = vmatprep.subr.mxu0 0.0
    %1378 = vmatpush1.msra.mxu0 %v1369
    %1379 = vmatprep.subr.mxu0 0.0
    %1380 = vmatpush1.msra.mxu0 %v1368
    %1381 = vmatprep.subr.mxu0 0.0
    %1382 = vmatpush1.msra.mxu0 %v1367
    %1383 = vmatprep.subr.mxu0 0.0
    %1384 = vmatpush1.msra.mxu0 %v1366
    %1385 = vmatprep.subr.mxu0 0.0
    %1386 = vmatpush1.msra.mxu0 %v1365
    %1387 = vmatprep.subr.mxu0 0.0
    %1388 = vmatpush1.msra.mxu0 %v1364
    %1389 = vmatprep.subr.mxu0 0.0
    %1390 = vmatpush1.msra.mxu0 %v1363
    %1391 = vmatprep.subr.mxu0 0.0
    %1392 = vmatpush1.msra.mxu0 %v1362
    %1393 = vmatprep.subr.mxu0 0.0
    %1394 = vmatpush1.msra.mxu0 %v1361
    %1395 = vmatprep.subr.mxu0 0.0
    %1396 = vmatpush1.msra.mxu0 %v1360
    %1397 = vmatprep.subr.mxu0 0.0
    %1398 = vmatpush1.msra.mxu0 %v1359
    %1399 = vmatprep.subr.mxu0 0.0
    %1400 = vmatpush1.msra.mxu0 %v1358
    %1401 = vmatprep.subr.mxu0 0.0
    %1402 = vmatpush1.msra.mxu0 %v1357
    %1403 = vmatprep.subr.mxu0 0.0
    %1404 = vmatpush1.msra.mxu0 %v1356
    %1405 = vmatprep.subr.mxu0 0.0
    %1406 = vmatpush1.msra.mxu0 %v1355
    %1407 = vmatprep.subr.mxu0 0.0
    %1408 = vmatpush1.msra.mxu0 %v1354
    %1409 = vmatprep.subr.mxu0 0.0
    %1410 = vmatpush2.msra.mxu0 0.0
    %1411 = vmatprep.subr.mxu0 0.0
    %1412 = vmatpush2.msra.mxu0 0.0
    %1413 = vmatprep.subr.mxu0 0.0
    %1414 = vmatpush2.msra.mxu0 0.0
    %1415 = vmatprep.subr.mxu0 0.0
    %1416 = vmatpush2.msra.mxu0 0.0
    %1417 = vmatprep.subr.mxu0 0.0
    %1418 = vmatpush2.msra.mxu0 0.0
    %1419 = vmatprep.subr.mxu0 0.0
    %1420 = vmatpush2.msra.mxu0 0.0
    %1421 = vmatprep.subr.mxu0 0.0
    %1422 = vmatpush2.msra.mxu0 0.0
    %1423 = vmatprep.subr.mxu0 0.0
    %1424 = vmatpush2.msra.mxu0 0.0
    %1425 = vmatprep.subr.mxu0 0.0
    %1426 = vmatpush2.msra.mxu0 0.0
    %1427 = vmatprep.subr.mxu0 0.0
    %1428 = vmatpush2.msra.mxu0 0.0
    %1429 = vmatprep.subr.mxu0 0.0
    %1430 = vmatpush2.msra.mxu0 0.0
    %1431 = vmatprep.subr.mxu0 0.0
    %1432 = vmatpush2.msra.mxu0 0.0
    %1433 = vmatprep.subr.mxu0 0.0
    %1434 = vmatpush2.msra.mxu0 0.0
    %1435 = vmatprep.subr.mxu0 0.0
    %1436 = vmatpush2.msra.mxu0 0.0
    %1437 = vmatprep.subr.mxu0 0.0
    %1438 = vmatpush2.msra.mxu0 0.0
    %1439 = vmatprep.subr.mxu0 0.0
    %1440 = vmatpush2.msra.mxu0 0.0
    %1441 = vmatprep.mubr.f32.mxu0 0.0
    %1442 = vmatmul.mubr.f32.gmra.mxu0 %v1353
    %v1443 = vpop.f32.mrf.mxu0
    %v1444 = vadd.f32 %v1375, %v1443
    %v1445 = vpop.f32.mrf.mxu0
    %1446 = vdwg.mxu0
    %v1447 = vmax.f32 %v1444, 0.0
    %v1448 = vld [vmem:[#allocation14] sm:$0xff]
    %v1449 = vld [vmem:[#allocation14 + $0x8] sm:$0xff]
    %v1450 = vld [vmem:[#allocation14 + $0x10] sm:$0xff]
    %v1451 = vld [vmem:[#allocation14 + $0x18] sm:$0xff]
    %v1452 = vld [vmem:[#allocation14 + $0x20] sm:$0xff]
    %v1453 = vld [vmem:[#allocation14 + $0x28] sm:$0xff]
    %v1454 = vld [vmem:[#allocation14 + $0x30] sm:$0xff]
    %v1455 = vld [vmem:[#allocation14 + $0x38] sm:$0xff]
    %v1456 = vld [vmem:[#allocation14 + $0x40] sm:$0xff]
    %v1457 = vld [vmem:[#allocation14 + $0x48] sm:$0xff]
    %v1458 = vld [vmem:[#allocation14 + $0x50] sm:$0xff]
    %v1459 = vld [vmem:[#allocation14 + $0x58] sm:$0xff]
    %v1460 = vld [vmem:[#allocation14 + $0x60] sm:$0xff]
    %v1461 = vld [vmem:[#allocation14 + $0x68] sm:$0xff]
    %v1462 = vld [vmem:[#allocation14 + $0x70] sm:$0xff]
    %v1463 = vld [vmem:[#allocation14 + $0x78] sm:$0xff]
    %v1464 = vld [vmem:[#allocation16] sm:$0x1]
    %v1466 = vlaneseq
    %v1467 = vshrl.u32 %v1466, 7
    %v1468 = vsub.s32 0, %v1467
    %v1469 = vrot.slane %v1464, %v1468
    %1471 = vmatprep.subr.mxu0 0.0
    %1472 = vmatpush1.msra.mxu0 %v1463
    %1473 = vmatprep.subr.mxu0 0.0
    %1474 = vmatpush1.msra.mxu0 %v1462
    %1475 = vmatprep.subr.mxu0 0.0
    %1476 = vmatpush1.msra.mxu0 %v1461
    %1477 = vmatprep.subr.mxu0 0.0
    %1478 = vmatpush1.msra.mxu0 %v1460
    %1479 = vmatprep.subr.mxu0 0.0
    %1480 = vmatpush1.msra.mxu0 %v1459
    %1481 = vmatprep.subr.mxu0 0.0
    %1482 = vmatpush1.msra.mxu0 %v1458
    %1483 = vmatprep.subr.mxu0 0.0
    %1484 = vmatpush1.msra.mxu0 %v1457
    %1485 = vmatprep.subr.mxu0 0.0
    %1486 = vmatpush1.msra.mxu0 %v1456
    %1487 = vmatprep.subr.mxu0 0.0
    %1488 = vmatpush1.msra.mxu0 %v1455
    %1489 = vmatprep.subr.mxu0 0.0
    %1490 = vmatpush1.msra.mxu0 %v1454
    %1491 = vmatprep.subr.mxu0 0.0
    %1492 = vmatpush1.msra.mxu0 %v1453
    %1493 = vmatprep.subr.mxu0 0.0
    %1494 = vmatpush1.msra.mxu0 %v1452
    %1495 = vmatprep.subr.mxu0 0.0
    %1496 = vmatpush1.msra.mxu0 %v1451
    %1497 = vmatprep.subr.mxu0 0.0
    %1498 = vmatpush1.msra.mxu0 %v1450
    %1499 = vmatprep.subr.mxu0 0.0
    %1500 = vmatpush1.msra.mxu0 %v1449
    %1501 = vmatprep.subr.mxu0 0.0
    %1502 = vmatpush1.msra.mxu0 %v1448
    %1503 = vmatprep.subr.mxu0 0.0
    %1504 = vmatpush2.msra.mxu0 0.0
    %1505 = vmatprep.subr.mxu0 0.0
    %1506 = vmatpush2.msra.mxu0 0.0
    %1507 = vmatprep.subr.mxu0 0.0
    %1508 = vmatpush2.msra.mxu0 0.0
    %1509 = vmatprep.subr.mxu0 0.0
    %1510 = vmatpush2.msra.mxu0 0.0
    %1511 = vmatprep.subr.mxu0 0.0
    %1512 = vmatpush2.msra.mxu0 0.0
    %1513 = vmatprep.subr.mxu0 0.0
    %1514 = vmatpush2.msra.mxu0 0.0
    %1515 = vmatprep.subr.mxu0 0.0
    %1516 = vmatpush2.msra.mxu0 0.0
    %1517 = vmatprep.subr.mxu0 0.0
    %1518 = vmatpush2.msra.mxu0 0.0
    %1519 = vmatprep.subr.mxu0 0.0
    %1520 = vmatpush2.msra.mxu0 0.0
    %1521 = vmatprep.subr.mxu0 0.0
    %1522 = vmatpush2.msra.mxu0 0.0
    %1523 = vmatprep.subr.mxu0 0.0
    %1524 = vmatpush2.msra.mxu0 0.0
    %1525 = vmatprep.subr.mxu0 0.0
    %1526 = vmatpush2.msra.mxu0 0.0
    %1527 = vmatprep.subr.mxu0 0.0
    %1528 = vmatpush2.msra.mxu0 0.0
    %1529 = vmatprep.subr.mxu0 0.0
    %1530 = vmatpush2.msra.mxu0 0.0
    %1531 = vmatprep.subr.mxu0 0.0
    %1532 = vmatpush2.msra.mxu0 0.0
    %1533 = vmatprep.subr.mxu0 0.0
    %1534 = vmatpush2.msra.mxu0 0.0
    %1535 = vmatprep.mubr.f32.mxu0 0.0
    %1536 = vmatmul.mubr.f32.gmra.mxu0 %v1447
    %v1537 = vpop.f32.mrf.mxu0
    %v1538 = vadd.f32 %v1469, %v1537
    %v1539 = vpop.f32.mrf.mxu0
    %1540 = vdwg.mxu0
    %v1541 = vmax.f32 %v1538, 0.0
    %1542 = vst [vmem:[#allocation17] sm:$0xff] %v1541
    // Predicated region
    $region74: #{tpu_custom_call.1} parent=1 // pred_check
      _
    $region75: #{tpu_custom_call.1} parent=1 // pred_check_branch
      %1544 = sbr.rel (0) target = $region77
    $region76: #{tpu_custom_call.1} parent=1 // pred_region
      %s1546 = ssub.s32 128, 128
      %1547 = vsyncadd [#allocation4], %s1546
      %s1549 = sshll.u32 [#allocation17], 4
      %s1550 = int_to_ptr.vmem [resolvable:$true] %s1549
      %1552 = dma.vmem_to_hbm [thread:$0]  %s1550, 128, %s9, [#allocation4]
    $region77: #{tpu_custom_call.1} parent=1 // pred_fallthru
      _
    // Predicated region
    $region78: #{tpu_custom_call.1} parent=1 // pred_check
      _
    $region79: #{tpu_custom_call.1} parent=1 // pred_check_branch
      %1554 = sbr.rel (0) target = $region81
    $region80: #{tpu_custom_call.1} parent=1 // pred_region
      %1555 = dma.done [#allocation4], 128
    $region81: #{tpu_custom_call.1} parent=1 // pred_fallthru
      _
    %1556 = vsyncpa [#allocation3], 1
    %1557 = vsyncpa [#allocation6], 1
    %1558 = vsyncpa [#allocation9], 1
    %1559 = vsyncpa [#allocation12], 1
    %1560 = vsyncpa [#allocation15], 1
    %1561 = vsyncpa [#allocation4], 1

</llo_original>
